<compile_context>
chip_gen: v6e
topology: v6e:2x2x1
jax: 0.10.0
libtpu: 0.0.40
codegen_flags: <defaults>
</compile_context>

<pallas_src>
import jax
import jax.numpy as jnp
from jax.experimental import pallas as pl
from jax.experimental.pallas import tpu as pltpu


# ---------------------------------------------------------------------------
# Grouped expert-FFN kernel.
#   grid = (num_token_blocks G, F // TF)
#   be_ref : scalar-prefetch (G,) int32  block -> expert id
#   nv_ref : scalar-prefetch (G,) int32  valid rows in block (0 => skip)
#   x_ref  : (TM, H)   bf16  tokens of this block (sorted by expert)
#   g_ref  : (TM, 1)   f32   top-1 gate weight (0 for padding rows)
#   w1_ref : (1, H, TF) bf16, b1_ref : (1, 1, TF) f32
#   w2_ref : (1, TF, H) bf16, b2_ref : (1, 1, H)  f32
#   o_ref  : (TM, H)   bf16  output (written once, at the last F step)
#   acc_ref: (TM, H)   f32   VMEM scratch accumulator over the F axis
# ---------------------------------------------------------------------------
def _moe_grouped_ffn_kernel(be_ref, nv_ref, x_ref, g_ref, w1_ref, b1_ref,
                            w2_ref, b2_ref, o_ref, acc_ref):
    b = pl.program_id(0)
    f = pl.program_id(1)
    last_f = pl.num_programs(1) - 1
    has_tokens = nv_ref[b] > 0

    @pl.when(has_tokens)
    def _():
        x = x_ref[...]                                            # (TM, H) bf16
        h = jnp.dot(x, w1_ref[0], preferred_element_type=jnp.float32)
        h = jnp.maximum(h + b1_ref[0], 0.0)                       # (TM, TF) f32
        y = jnp.dot(h.astype(x.dtype), w2_ref[0],
                    preferred_element_type=jnp.float32)           # (TM, H) f32

        @pl.when(f == 0)
        def _():
            acc_ref[...] = y                                      # direct store

        @pl.when(f != 0)
        def _():
            acc_ref[...] += y

        @pl.when(f == last_f)
        def _():
            # add output bias once, fold in the top-1 gate weight (0 for
            # padding rows -> their outputs are exactly zero), cast to bf16.
            o_ref[...] = (g_ref[...] * (acc_ref[...] + b2_ref[0])
                          ).astype(o_ref.dtype)

    @pl.when(jnp.logical_and(jnp.logical_not(has_tokens), f == last_f))
    def _():
        o_ref[...] = jnp.zeros_like(o_ref)


# ---------------------------------------------------------------------------
# VMEM budgeting (generation aware).
# ---------------------------------------------------------------------------
def _vmem_budget_bytes():
    cap = 64 * 1024 * 1024                       # conservative (v7x per-TC)
    try:
        info = pltpu.get_tpu_info()
        cap = int(getattr(info, "vmem_capacity_bytes", cap))
    except Exception:
        pass
    if cap < (32 << 20):
        cap = 64 << 20
    # ~56 MiB on v7x (64 MiB physical), ~100 MiB on v5e/v6e (128 MiB).
    return min((cap * 7) // 8, 100 * 1024 * 1024)


def _tile_footprint_bytes(tm, tf, H):
    # Double-buffered per-step inputs + output, plus the single f32 scratch.
    per_step = (tm * H * 2      # x  bf16
                + tm * 4        # gate f32
                + H * tf * 2    # W1 chunk bf16
                + tf * 4        # b1 chunk f32
                + tf * H * 2    # W2 chunk bf16
                + H * 4         # b2 f32
                + tm * H * 2)   # out bf16
    return 2 * per_step + tm * H * 4


def _grouped_moe_ffn(block_to_expert, block_valid, x_pad, g_pad,
                     w1, b1, w2, b2, *, tm, tf, vmem_limit):
    n_rows, H = x_pad.shape
    E, _, F = w1.shape
    G = n_rows // tm
    nf = F // tf

    return pl.pallas_call(
        _moe_grouped_ffn_kernel,
        out_shape=jax.ShapeDtypeStruct((n_rows, H), jnp.bfloat16),
        grid_spec=pltpu.PrefetchScalarGridSpec(
            num_scalar_prefetch=2,
            grid=(G, nf),
            in_specs=[
                pl.BlockSpec((tm, H), lambda b, f, be, nv: (b, 0)),            # x
                pl.BlockSpec((tm, 1), lambda b, f, be, nv: (b, 0)),            # gate
                pl.BlockSpec((1, H, tf), lambda b, f, be, nv: (be[b], 0, f)),  # W1
                pl.BlockSpec((1, 1, tf), lambda b, f, be, nv: (be[b], 0, f)),  # b1
                pl.BlockSpec((1, tf, H), lambda b, f, be, nv: (be[b], f, 0)),  # W2
                pl.BlockSpec((1, 1, H), lambda b, f, be, nv: (be[b], 0, 0)),   # b2
            ],
            out_specs=pl.BlockSpec((tm, H), lambda b, f, be, nv: (b, 0)),
            scratch_shapes=[pltpu.VMEM((tm, H), jnp.float32)],
        ),
        compiler_params=pltpu.CompilerParams(
            dimension_semantics=("parallel", "arbitrary"),
            vmem_limit_bytes=int(vmem_limit)),
    )(block_to_expert, block_valid, x_pad, g_pad, w1, b1, w2, b2)


# ---------------------------------------------------------------------------
# Gating (plain XLA: E << 128 lanes, a Pallas gate would only produce masked
# partial stores).  Shared by the forward pass and the reference.
# ---------------------------------------------------------------------------
def _gate_top1(x2d, wg, bg):
    logits = jnp.dot(x2d, wg.astype(x2d.dtype),
                     preferred_element_type=jnp.float32)
    logits = logits + bg.astype(jnp.float32)
    probs = jax.nn.softmax(logits, axis=-1)                      # (T, E)
    top1 = jnp.argmax(probs, axis=-1).astype(jnp.int32)
    gate_w = jnp.max(probs, axis=-1).astype(jnp.float32)
    return top1, gate_w


# ---------------------------------------------------------------------------
# Full MoE forward (top-1 / switch gating, single expert group).
# Input is seq-major (S, B, H) as in ort_moe's (s, b, m) convention.
# ---------------------------------------------------------------------------
def mixture_of_experts_forward(x_sbh, params, *, tm=256, tf=512):
    S, B, H = x_sbh.shape
    T = S * B
    E, _, F = params["w1"].shape

    tm = int(tm)
    tf = min(int(tf), F)

    # ---- tile / VMEM budgeting (generation aware) --------------------------
    budget = _vmem_budget_bytes()
    while (_tile_footprint_bytes(tm, tf, H) > budget
           and tf % 256 == 0 and F % (tf // 2) == 0):
        tf //= 2
    while (_tile_footprint_bytes(tm, tf, H) > budget
           and tm >= 256 and tm % 32 == 0):
        tm //= 2
    assert tm % 16 == 0, "tm must respect bf16 (16,128) sublane packing"
    assert F % tf == 0 and (tf == F or tf % 128 == 0)
    # TODO(synk): for very large H (>= ~8K on v7x) add an H-contraction grid
    # axis instead of holding full-H activation / W2 tiles in VMEM.
    vmem_limit = min(max(_tile_footprint_bytes(tm, tf, H) + (4 << 20),
                         32 << 20), budget)

    x = x_sbh.reshape(T, H)

    # ---- 1) gating ----------------------------------------------------------
    top1, gate_w = _gate_top1(x, params["wg"], params["bg"])

    # ---- grouped dispatch bookkeeping (megablocks-style) -------------------
    order = jnp.argsort(top1).astype(jnp.int32)                  # tokens by expert
    sorted_e = top1[order]                                       # (T,)
    counts = jnp.bincount(top1, length=E).astype(jnp.int32)      # (E,)
    blocks_per_e = (counts + tm - 1) // tm                       # (E,)
    block_start = jnp.cumsum(blocks_per_e) - blocks_per_e        # in blocks
    group_start = block_start * tm                               # in rows
    token_start = jnp.cumsum(counts) - counts
    p = jnp.arange(T, dtype=jnp.int32)
    rows = (group_start[sorted_e] + (p - token_start[sorted_e])).astype(jnp.int32)

    G = pl.cdiv(T, tm) + E            # static upper bound on # token blocks
    n_rows = G * tm
    row_to_token = jnp.full((n_rows,), T, dtype=jnp.int32).at[rows].set(order)
    token_to_row = jnp.zeros((T,), dtype=jnp.int32).at[order].set(rows)
    gidx = jnp.arange(G, dtype=jnp.int32)
    block_to_expert = jnp.minimum(
        jnp.searchsorted(jnp.cumsum(blocks_per_e), gidx, side="right"),
        E - 1).astype(jnp.int32)
    # valid rows per block; 0 => pure-padding block, skipped in the kernel.
    block_valid = jnp.clip(
        counts[block_to_expert] - (gidx - block_start[block_to_expert]) * tm,
        0, tm).astype(jnp.int32)

    # gather tokens into block-contiguous layout (padding rows -> zeros,
    # padding gate weight -> 0 so their outputs are exactly zero).
    # TODO(synk): fuse this gather (and the output un-permute) into the kernel
    # via a row_to_token scalar prefetch + pl.Element row index_map.
    xb = x.astype(jnp.bfloat16)
    x_pad = jnp.take(
        jnp.concatenate([xb, jnp.zeros((1, H), jnp.bfloat16)], axis=0),
        row_to_token, axis=0)                                    # (n_rows, H)
    g_pad = jnp.take(
        jnp.concatenate([gate_w, jnp.zeros((1,), jnp.float32)], axis=0),
        row_to_token, axis=0)[:, None]                           # (n_rows, 1)

    w1 = params["w1"].astype(jnp.bfloat16)
    w2 = params["w2"].astype(jnp.bfloat16)
    b1 = params["b1"].astype(jnp.float32)
    b2 = params["b2"].astype(jnp.float32)
    # TODO(synk): fp8 expert weights with per-expert scales (v7x) would halve
    # weight streaming again; needs scale handling + quality validation.

    # ---- 2+3) expert FFNs + gate combine (Pallas hot path) -----------------
    out_pad = _grouped_moe_ffn(block_to_expert, block_valid, x_pad, g_pad,
                               w1, b1, w2, b2, tm=tm, tf=tf,
                               vmem_limit=vmem_limit)            # (n_rows, H) bf16

    out = jnp.take(out_pad, token_to_row, axis=0)                # back to token order
    return out.reshape(S, B, H).astype(x_sbh.dtype)


# ---------------------------------------------------------------------------
# Pure-JAX reference (same bf16-input / f32-accumulate math) for sanity check.
# ---------------------------------------------------------------------------
def _ref_forward(x_sbh, params):
    S, B, H = x_sbh.shape
    T = S * B
    x = x_sbh.reshape(T, H)
    top1, gate_w = _gate_top1(x, params["wg"], params["bg"])

    xb = x.astype(jnp.bfloat16).astype(jnp.float32)
    w1 = params["w1"].astype(jnp.bfloat16).astype(jnp.float32)
    w2 = params["w2"].astype(jnp.bfloat16).astype(jnp.float32)
    h = jnp.maximum(jnp.einsum("th,ehf->etf", xb, w1)
                    + params["b1"].astype(jnp.float32), 0.0)
    h = h.astype(jnp.bfloat16).astype(jnp.float32)
    y = jnp.einsum("etf,efh->eth", h, w2) + params["b2"].astype(jnp.float32)
    out = gate_w[:, None] * y[top1, jnp.arange(T), :]
    return out.reshape(S, B, H)


if __name__ == "__main__":
    # Small shapes: seq=8, batch=2, hidden=32, ffn=64, experts=4
    S, B, H, F, E = 8, 2, 32, 64, 4

    key = jax.random.PRNGKey(0)
    kx, kg, kbg, k1, kb1, k2, kb2 = jax.random.split(key, 7)

    x = jax.random.normal(kx, (S, B, H), dtype=jnp.float32)

    params = {
        # gate: Linear(H -> E)
        "wg": jax.random.normal(kg, (H, E), dtype=jnp.float32) * 0.1,
        "bg": jax.random.normal(kbg, (1, E), dtype=jnp.float32) * 0.01,
        # experts: E x FFN(H -> F -> H)
        "w1": jax.random.normal(k1, (E, H, F), dtype=jnp.float32) * 0.1,
        "b1": jax.random.normal(kb1, (E, 1, F), dtype=jnp.float32) * 0.01,
        "w2": jax.random.normal(k2, (E, F, H), dtype=jnp.float32) * 0.1,
        "b2": jax.random.normal(kb2, (E, 1, H), dtype=jnp.float32) * 0.01,
    }

    out = jax.jit(mixture_of_experts_forward)(x, params)
    out = jax.block_until_ready(out)

    ref = _ref_forward(x, params)
    assert out.shape == (S, B, H)
    err = float(jnp.max(jnp.abs(out - ref)))
    assert jnp.allclose(out, ref, atol=2e-2, rtol=2e-2), err

    print("KERNEL_OK")
</pallas_src>

<mosaic_0001>
module attributes {stable_mosaic.version = 11 : i64} {
  func.func private @main(%arg0: i32) attributes {dimension_semantics = [#tpu.dimension_semantics<core_parallel>], iteration_bounds = array<i64: 2>, tpu.core_type = #tpu.core_type<sc_scalar_subcore>, window_params = []} {
    return
  }
}

module attributes {stable_mosaic.version = 11 : i64} {
  func.func private @main(%arg0: i32) attributes {dimension_semantics = [#tpu.dimension_semantics<core_parallel>], iteration_bounds = array<i64: 2>, tpu.core_type = #tpu.core_type<sc_scalar_subcore>, window_params = []} {
    return
  }
}

module attributes {stable_mosaic.version = 11 : i64} {
  func.func @_moe_grouped_ffn_kernel(%arg0: i32, %arg1: i32, %arg2: memref<5xi32, #tpu.memory_space<smem>>, %arg3: memref<5xi32, #tpu.memory_space<smem>>, %arg4: memref<256x32xbf16, #tpu.memory_space<vmem>>, %arg5: memref<256x1xf32, #tpu.memory_space<vmem>>, %arg6: memref<1x32x64xbf16, #tpu.memory_space<vmem>>, %arg7: memref<1x1x64xf32, #tpu.memory_space<vmem>>, %arg8: memref<1x64x32xbf16, #tpu.memory_space<vmem>>, %arg9: memref<1x1x32xf32, #tpu.memory_space<vmem>>, %arg10: memref<256x32xbf16, #tpu.memory_space<vmem>>, %arg11: memref<256x32xf32, #tpu.memory_space<vmem>>) attributes {dimension_semantics = [#tpu.dimension_semantics<parallel>, #tpu.dimension_semantics<arbitrary>], iteration_bounds = array<i64: 5, 1>, scalar_prefetch = 2 : i64, scratch_operands = 1 : i64, tpu.core_type = #tpu.core_type<tc>, window_params = [{transform_indices = @transform_0, window_bounds = array<i64: 256, 32>}, {transform_indices = @transform_1, window_bounds = array<i64: 256, 1>}, {transform_indices = @transform_2, window_bounds = array<i64: 1, 32, 64>}, {transform_indices = @transform_3, window_bounds = array<i64: 1, 1, 64>}, {transform_indices = @transform_4, window_bounds = array<i64: 1, 64, 32>}, {transform_indices = @transform_5, window_bounds = array<i64: 1, 1, 32>}, {transform_indices = @transform_6, window_bounds = array<i64: 256, 32>}]} {
    %0 = arith.index_cast %arg0 : i32 to index
    %1 = memref.load %arg3[%0] : memref<5xi32, #tpu.memory_space<smem>>
    %c0_i32 = arith.constant 0 : i32
    %2 = arith.cmpi sgt, %1, %c0_i32 : i32
    %3 = arith.extui %2 : i1 to i32
    %c0_i32_0 = arith.constant 0 : i32
    %4 = arith.cmpi ne, %3, %c0_i32_0 : i32
    scf.if %4 {
      %c0 = arith.constant 0 : index
      %c0_3 = arith.constant 0 : index
      %10 = vector.load %arg4[%c0, %c0_3] : memref<256x32xbf16, #tpu.memory_space<vmem>>, vector<256x32xbf16>
      %c0_4 = arith.constant 0 : index
      %c0_5 = arith.constant 0 : index
      %c0_6 = arith.constant 0 : index
      %11 = vector.load %arg6[%c0_4, %c0_5, %c0_6] : memref<1x32x64xbf16, #tpu.memory_space<vmem>>, vector<1x32x64xbf16>
      %12 = vector.shape_cast %11 : vector<1x32x64xbf16> to vector<32x64xbf16>
      %cst = arith.constant dense<0.000000e+00> : vector<256x64xf32>
      %13 = tpu.matmul %10, %12, %cst {dimension_numbers = #tpu.dot_dimension_numbers<[1], [0], [0], [1], [0, 0, 1, 1], [], []>} : vector<256x32xbf16>, vector<32x64xbf16>, vector<256x64xf32> -> vector<256x64xf32>
      %c0_7 = arith.constant 0 : index
      %c0_8 = arith.constant 0 : index
      %c0_9 = arith.constant 0 : index
      %14 = vector.load %arg7[%c0_7, %c0_8, %c0_9] : memref<1x1x64xf32, #tpu.memory_space<vmem>>, vector<1x1x64xf32>
      %15 = vector.shape_cast %14 : vector<1x1x64xf32> to vector<1x64xf32>
      %16 = vector.broadcast %15 : vector<1x64xf32> to vector<256x64xf32>
      %17 = arith.addf %13, %16 : vector<256x64xf32>
      %cst_10 = arith.constant 0.000000e+00 : f32
      %18 = vector.broadcast %cst_10 : f32 to vector<256x64xf32>
      %19 = arith.maximumf %17, %18 : vector<256x64xf32>
      %20 = arith.truncf %19 : vector<256x64xf32> to vector<256x64xbf16>
      %c0_11 = arith.constant 0 : index
      %c0_12 = arith.constant 0 : index
      %c0_13 = arith.constant 0 : index
      %21 = vector.load %arg8[%c0_11, %c0_12, %c0_13] : memref<1x64x32xbf16, #tpu.memory_space<vmem>>, vector<1x64x32xbf16>
      %22 = vector.shape_cast %21 : vector<1x64x32xbf16> to vector<64x32xbf16>
      %cst_14 = arith.constant dense<0.000000e+00> : vector<256x32xf32>
      %23 = tpu.matmul %20, %22, %cst_14 {dimension_numbers = #tpu.dot_dimension_numbers<[1], [0], [0], [1], [0, 0, 1, 1], [], []>} : vector<256x64xbf16>, vector<64x32xbf16>, vector<256x32xf32> -> vector<256x32xf32>
      %c0_i32_15 = arith.constant 0 : i32
      %24 = arith.cmpi eq, %arg1, %c0_i32_15 : i32
      %25 = arith.extui %24 : i1 to i32
      %c0_i32_16 = arith.constant 0 : i32
      %26 = arith.cmpi ne, %25, %c0_i32_16 : i32
      scf.if %26 {
        %c0_21 = arith.constant 0 : index
        %c0_22 = arith.constant 0 : index
        %33 = vector.load %arg11[%c0_21, %c0_22] : memref<256x32xf32, #tpu.memory_space<vmem>>, vector<256x32xf32>
        tpu.vector_store %arg11[%c0_21, %c0_22], %23 {strides = array<i32>} : memref<256x32xf32, #tpu.memory_space<vmem>>, vector<256x32xf32>,
      } else {
      }
      %c0_i32_17 = arith.constant 0 : i32
      %27 = arith.cmpi ne, %arg1, %c0_i32_17 : i32
      %28 = arith.extui %27 : i1 to i32
      %c0_i32_18 = arith.constant 0 : i32
      %29 = arith.cmpi ne, %28, %c0_i32_18 : i32
      scf.if %29 {
        %c0_21 = arith.constant 0 : index
        %c0_22 = arith.constant 0 : index
        %33 = vector.load %arg11[%c0_21, %c0_22] : memref<256x32xf32, #tpu.memory_space<vmem>>, vector<256x32xf32>
        %34 = arith.addf %33, %23 : vector<256x32xf32>
        %c0_23 = arith.constant 0 : index
        %c0_24 = arith.constant 0 : index
        %35 = vector.load %arg11[%c0_23, %c0_24] : memref<256x32xf32, #tpu.memory_space<vmem>>, vector<256x32xf32>
        tpu.vector_store %arg11[%c0_23, %c0_24], %34 {strides = array<i32>} : memref<256x32xf32, #tpu.memory_space<vmem>>, vector<256x32xf32>,
      } else {
      }
      %c0_i32_19 = arith.constant 0 : i32
      %30 = arith.cmpi eq, %arg1, %c0_i32_19 : i32
      %31 = arith.extui %30 : i1 to i32
      %c0_i32_20 = arith.constant 0 : i32
      %32 = arith.cmpi ne, %31, %c0_i32_20 : i32
      scf.if %32 {
        %c0_21 = arith.constant 0 : index
        %c0_22 = arith.constant 0 : index
        %33 = vector.load %arg5[%c0_21, %c0_22] : memref<256x1xf32, #tpu.memory_space<vmem>>, vector<256x1xf32>
        %c0_23 = arith.constant 0 : index
        %c0_24 = arith.constant 0 : index
        %34 = vector.load %arg11[%c0_23, %c0_24] : memref<256x32xf32, #tpu.memory_space<vmem>>, vector<256x32xf32>
        %c0_25 = arith.constant 0 : index
        %c0_26 = arith.constant 0 : index
        %c0_27 = arith.constant 0 : index
        %35 = vector.load %arg9[%c0_25, %c0_26, %c0_27] : memref<1x1x32xf32, #tpu.memory_space<vmem>>, vector<1x1x32xf32>
        %36 = vector.shape_cast %35 : vector<1x1x32xf32> to vector<1x32xf32>
        %37 = vector.broadcast %36 : vector<1x32xf32> to vector<256x32xf32>
        %38 = arith.addf %34, %37 : vector<256x32xf32>
        %39 = vector.broadcast %33 : vector<256x1xf32> to vector<256x32xf32>
        %40 = arith.mulf %39, %38 : vector<256x32xf32>
        %41 = arith.truncf %40 : vector<256x32xf32> to vector<256x32xbf16>
        %c0_28 = arith.constant 0 : index
        %c0_29 = arith.constant 0 : index
        %42 = vector.load %arg10[%c0_28, %c0_29] : memref<256x32xbf16, #tpu.memory_space<vmem>>, vector<256x32xbf16>
        tpu.vector_store %arg10[%c0_28, %c0_29], %41 {strides = array<i32>} : memref<256x32xbf16, #tpu.memory_space<vmem>>, vector<256x32xbf16>,
      } else {
      }
    } else {
    }
    %true = arith.constant true
    %5 = arith.xori %2, %true : i1
    %c0_i32_1 = arith.constant 0 : i32
    %6 = arith.cmpi eq, %arg1, %c0_i32_1 : i32
    %7 = arith.andi %5, %6 : i1
    %8 = arith.extui %7 : i1 to i32
    %c0_i32_2 = arith.constant 0 : i32
    %9 = arith.cmpi ne, %8, %c0_i32_2 : i32
    scf.if %9 {
      %cst = arith.constant 0.000000e+00 : bf16
      %10 = vector.broadcast %cst : bf16 to vector<256x32xbf16>
      %c0 = arith.constant 0 : index
      %c0_3 = arith.constant 0 : index
      %11 = vector.load %arg10[%c0, %c0_3] : memref<256x32xbf16, #tpu.memory_space<vmem>>, vector<256x32xbf16>
      tpu.vector_store %arg10[%c0, %c0_3], %10 {strides = array<i32>} : memref<256x32xbf16, #tpu.memory_space<vmem>>, vector<256x32xbf16>,
    } else {
    }
    return
  }
  func.func @transform_0(%arg0: i32, %arg1: i32, %arg2: memref<5xi32, #tpu.memory_space<smem>>, %arg3: memref<5xi32, #tpu.memory_space<smem>>) -> (i32, i32) {
    %c0_i32 = arith.constant 0 : i32
    %c0_i32_0 = arith.constant 0 : i32
    return %arg0, %c0_i32 : i32, i32
  }
  func.func @transform_1(%arg0: i32, %arg1: i32, %arg2: memref<5xi32, #tpu.memory_space<smem>>, %arg3: memref<5xi32, #tpu.memory_space<smem>>) -> (i32, i32) {
    %c0_i32 = arith.constant 0 : i32
    %c0_i32_0 = arith.constant 0 : i32
    return %arg0, %c0_i32 : i32, i32
  }
  func.func @transform_2(%arg0: i32, %arg1: i32, %arg2: memref<5xi32, #tpu.memory_space<smem>>, %arg3: memref<5xi32, #tpu.memory_space<smem>>) -> (i32, i32, i32) {
    %0 = arith.index_cast %arg0 : i32 to index
    %1 = memref.load %arg2[%0] : memref<5xi32, #tpu.memory_space<smem>>
    %c0_i32 = arith.constant 0 : i32
    %c0_i32_0 = arith.constant 0 : i32
    return %1, %c0_i32, %arg1 : i32, i32, i32
  }
  func.func @transform_3(%arg0: i32, %arg1: i32, %arg2: memref<5xi32, #tpu.memory_space<smem>>, %arg3: memref<5xi32, #tpu.memory_space<smem>>) -> (i32, i32, i32) {
    %0 = arith.index_cast %arg0 : i32 to index
    %1 = memref.load %arg2[%0] : memref<5xi32, #tpu.memory_space<smem>>
    %c0_i32 = arith.constant 0 : i32
    %c0_i32_0 = arith.constant 0 : i32
    return %1, %c0_i32, %arg1 : i32, i32, i32
  }
  func.func @transform_4(%arg0: i32, %arg1: i32, %arg2: memref<5xi32, #tpu.memory_space<smem>>, %arg3: memref<5xi32, #tpu.memory_space<smem>>) -> (i32, i32, i32) {
    %0 = arith.index_cast %arg0 : i32 to index
    %1 = memref.load %arg2[%0] : memref<5xi32, #tpu.memory_space<smem>>
    %c0_i32 = arith.constant 0 : i32
    %c0_i32_0 = arith.constant 0 : i32
    return %1, %arg1, %c0_i32 : i32, i32, i32
  }
  func.func @transform_5(%arg0: i32, %arg1: i32, %arg2: memref<5xi32, #tpu.memory_space<smem>>, %arg3: memref<5xi32, #tpu.memory_space<smem>>) -> (i32, i32, i32) {
    %0 = arith.index_cast %arg0 : i32 to index
    %1 = memref.load %arg2[%0] : memref<5xi32, #tpu.memory_space<smem>>
    %c0_i32 = arith.constant 0 : i32
    %c0_i32_0 = arith.constant 0 : i32
    %c0_i32_1 = arith.constant 0 : i32
    return %1, %c0_i32, %c0_i32_0 : i32, i32, i32
  }
  func.func @transform_6(%arg0: i32, %arg1: i32, %arg2: memref<5xi32, #tpu.memory_space<smem>>, %arg3: memref<5xi32, #tpu.memory_space<smem>>) -> (i32, i32) {
    %c0_i32 = arith.constant 0 : i32
    %c0_i32_0 = arith.constant 0 : i32
    return %arg0, %c0_i32 : i32, i32
  }
}

</mosaic_0001>

<llo_original>
// kernel: custom-call
$region0: #{custom-call}
  %s0 = inlined_call_operand.vmem [shape: u32[5], index: 0, kind: output, shape index: {}]

// kernel: mixture_of_experts_forward.1
$region0: #{mixture_of_experts_forward.1}
  #allocation0 [shape = 'u32[]', space=smem, size = 0x4, offset = 0x4, fixed_abs, tag = 'smem constant byte address 0x4 - core index']
  #allocation1 [shape = 'u32[144,128]{1,0:T(1,128)}', space=vmem, size = 0x12000, scoped, tag = 'internal scratch']
  #allocation2 [shape = 'f32[256,32]{1,0:T(8,128)}', space=vmem, size = 0x20000, scoped, tag = 'scratch operand']
  #allocation3 [shape = 's32[1]{0}', space=sflag, size = 0x4, scoped, tag = 'scoped memory for mixture_of_experts_forward.1']
  #allocation4 [shape = 'u8[512]{0}', space=smem, size = 0x200, scoped, tag = 'prefetched SMEM operand 0']
  #allocation5 [shape = 'u8[512]{0}', space=smem, size = 0x200, scoped, tag = 'prefetched SMEM operand 1']
  %s0 = inlined_call_operand.vmem [shape: s32[5], index: 0, kind: input, shape index: {}]
  %s1 = inlined_call_operand.vmem [shape: s32[5], index: 1, kind: input, shape index: {}]
  %s2 = inlined_call_operand.vmem [shape: bf16[1280,32], index: 2, kind: input, shape index: {}]
  %s3 = inlined_call_operand.vmem [shape: f32[1280,1], index: 3, kind: input, shape index: {}]
  %s4 = inlined_call_operand.vmem [shape: bf16[4,32,64], index: 4, kind: input, shape index: {}]
  %s5 = inlined_call_operand.vmem [shape: f32[4,1,64], index: 5, kind: input, shape index: {}]
  %s6 = inlined_call_operand.vmem [shape: bf16[4,64,32], index: 6, kind: input, shape index: {}]
  %s7 = inlined_call_operand.vmem [shape: f32[4,1,32], index: 7, kind: input, shape index: {}]
  %s8 = inlined_call_operand.vmem [shape: bf16[1280,32], index: 8, kind: output, shape index: {}]
  %s9 = sld [smem:[#allocation0]]
  $region77: #{mixture_of_experts_forward.1} parent=0
    _
  %s11 = ssub.s32 1, %s9
  %s12 = scalar_select 0, %s11, %s9
  %s13 = sshll.u32 %s0, 4
  %s14 = int_to_ptr.vmem [resolvable:$true] %s13
  %16 = dma.vmem_to_smem %s14, 16, [#allocation4], [#allocation3]
  %s17 = sshll.u32 %s1, 4
  %s18 = int_to_ptr.vmem [resolvable:$true] %s17
  %20 = dma.vmem_to_smem %s18, 16, [#allocation5], [#allocation3]
  %21 = dma.done [#allocation3], 32
  %22 = sfence
  loop: start=0, step=1, limit=7
  $region2: #{mixture_of_experts_forward.1} parent=0 // loop_pre_header
    _
  $region3: #{mixture_of_experts_forward.1} parent=0 // loop_header
    %s24 = sphi 0, %s28
    %p25 = scmp.ge.s32.totalorder %s24, 7
    %s31 = sphi 0, %s43
    %s32 = sphi 0, %s39
    %s33 = sphi 0, %s31
    %s34 = sphi 0, %s32
    %s35 = sphi 0, %s33
    %s36 = sphi 0, %s34
    %s46 = sphi 0, %s48
    %s49 = sphi 0, %s46
    %s50 = sphi 0, %s49
    %s66 = sphi 0, %s50
    %s72 = sphi 0, %s74
    %s75 = sphi 0, %s72
    %s76 = sphi 0, %s75
    %s92 = sphi 0, %s76
    %s102 = sphi 0, %s104
    %s105 = sphi 0, %s102
    %s106 = sphi 0, %s105
    %s122 = sphi 0, %s106
    %s132 = sphi 0, %s134
    %s135 = sphi 0, %s132
    %s136 = sphi 0, %s135
    %s152 = sphi 0, %s136
    %s162 = sphi 0, %s164
    %s165 = sphi 0, %s162
    %s166 = sphi 0, %s165
    %s182 = sphi 0, %s166
    %s190 = sphi 0, %s192
    %s193 = sphi 0, %s190
    %s194 = sphi 0, %s193
    %s210 = sphi 0, %s194
    %s216 = sphi 0, %s218
    %s219 = sphi 0, %s216
    %s220 = sphi 0, %s219
    %s236 = sphi 0, %s220
  $region4: #{mixture_of_experts_forward.1} parent=0 // loop_header_branch
    %27 = sbr.rel (%p25) target = $region8
  $region5: #{mixture_of_experts_forward.1} parent=0 // loop_body
    %s29 = ssub.s32 %s24, 1
    %s30 = ssub.s32 %s24, 2
    %s37 = sadd.s32 1, %s32
    %p38 = scmp.ge.s32.totalorder %s37, 1
    %s39 = scalar_select %p38, 0, %s37
    %s40 = sadd.s32 1, %s31
    %s41 = scalar_select %p38, %s40, %s31
    %p42 = scmp.ge.s32.totalorder %s41, 5
    %s43 = scalar_select %p42, 0, %s41
    %s44 = ssub.s32 %s31, %s43
    %p45 = scmp.eq.s32.totalorder %s44, 0
    %s47 = sadd.s32 %s46, 1
    %s48 = scalar_select %p45, %s46, %s47
    %p51 = pneg %p45
    %p52 = scmp.eq.s32.totalorder %s24, 4
    %p53 = por %p51, %p52
    %p54 = scmp.ne.s32.totalorder %s46, %s49
    %p55 = scmp.eq.s32.totalorder %s24, 0
    %p56 = por %p54, %p55
    %p57 = scmp.ne.s32.totalorder %s46, %s49
    %p58 = scmp.eq.s32.totalorder %s29, 4
    %p59 = por %p57, %p58
    %p60 = scmp.ne.s32.totalorder %s49, %s50
    %p61 = scmp.eq.s32.totalorder %s29, 0
    %p62 = por %p60, %p61
    %p63 = scmp.ne.s32.totalorder %s49, %s50
    %p64 = scmp.eq.s32.totalorder %s30, 4
    %p65 = por %p63, %p64
    %p67 = scmp.ne.s32.totalorder %s50, %s66
    %p68 = scmp.eq.s32.totalorder %s30, 0
    %p69 = por %p67, %p68
    %s70 = ssub.s32 %s31, %s43
    %p71 = scmp.eq.s32.totalorder %s70, 0
    %s73 = sadd.s32 %s72, 1
    %s74 = scalar_select %p71, %s72, %s73
    %p77 = pneg %p71
    %p78 = scmp.eq.s32.totalorder %s24, 4
    %p79 = por %p77, %p78
    %p80 = scmp.ne.s32.totalorder %s72, %s75
    %p81 = scmp.eq.s32.totalorder %s24, 0
    %p82 = por %p80, %p81
    %p83 = scmp.ne.s32.totalorder %s72, %s75
    %p84 = scmp.eq.s32.totalorder %s29, 4
    %p85 = por %p83, %p84
    %p86 = scmp.ne.s32.totalorder %s75, %s76
    %p87 = scmp.eq.s32.totalorder %s29, 0
    %p88 = por %p86, %p87
    %p89 = scmp.ne.s32.totalorder %s75, %s76
    %p90 = scmp.eq.s32.totalorder %s30, 4
    %p91 = por %p89, %p90
    %p93 = scmp.ne.s32.totalorder %s76, %s92
    %p94 = scmp.eq.s32.totalorder %s30, 0
    %p95 = por %p93, %p94
    %s96 = sld [smem:[#allocation4 + %s31]]
    %s97 = sld [smem:[#allocation4 + %s43]]
    %s98 = ssub.s32 %s96, %s97
    %s99 = ssub.s32 %s32, %s39
    %s100 = sor.u32 %s98, %s99
    %p101 = scmp.eq.s32.totalorder %s100, 0
    %s103 = sadd.s32 %s102, 1
    %s104 = scalar_select %p101, %s102, %s103
    %p107 = pneg %p101
    %p108 = scmp.eq.s32.totalorder %s24, 4
    %p109 = por %p107, %p108
    %p110 = scmp.ne.s32.totalorder %s102, %s105
    %p111 = scmp.eq.s32.totalorder %s24, 0
    %p112 = por %p110, %p111
    %p113 = scmp.ne.s32.totalorder %s102, %s105
    %p114 = scmp.eq.s32.totalorder %s29, 4
    %p115 = por %p113, %p114
    %p116 = scmp.ne.s32.totalorder %s105, %s106
    %p117 = scmp.eq.s32.totalorder %s29, 0
    %p118 = por %p116, %p117
    %p119 = scmp.ne.s32.totalorder %s105, %s106
    %p120 = scmp.eq.s32.totalorder %s30, 4
    %p121 = por %p119, %p120
    %p123 = scmp.ne.s32.totalorder %s106, %s122
    %p124 = scmp.eq.s32.totalorder %s30, 0
    %p125 = por %p123, %p124
    %s126 = sld [smem:[#allocation4 + %s31]]
    %s127 = sld [smem:[#allocation4 + %s43]]
    %s128 = ssub.s32 %s126, %s127
    %s129 = ssub.s32 %s32, %s39
    %s130 = sor.u32 %s128, %s129
    %p131 = scmp.eq.s32.totalorder %s130, 0
    %s133 = sadd.s32 %s132, 1
    %s134 = scalar_select %p131, %s132, %s133
    %p137 = pneg %p131
    %p138 = scmp.eq.s32.totalorder %s24, 4
    %p139 = por %p137, %p138
    %p140 = scmp.ne.s32.totalorder %s132, %s135
    %p141 = scmp.eq.s32.totalorder %s24, 0
    %p142 = por %p140, %p141
    %p143 = scmp.ne.s32.totalorder %s132, %s135
    %p144 = scmp.eq.s32.totalorder %s29, 4
    %p145 = por %p143, %p144
    %p146 = scmp.ne.s32.totalorder %s135, %s136
    %p147 = scmp.eq.s32.totalorder %s29, 0
    %p148 = por %p146, %p147
    %p149 = scmp.ne.s32.totalorder %s135, %s136
    %p150 = scmp.eq.s32.totalorder %s30, 4
    %p151 = por %p149, %p150
    %p153 = scmp.ne.s32.totalorder %s136, %s152
    %p154 = scmp.eq.s32.totalorder %s30, 0
    %p155 = por %p153, %p154
    %s156 = sld [smem:[#allocation4 + %s31]]
    %s157 = sld [smem:[#allocation4 + %s43]]
    %s158 = ssub.s32 %s156, %s157
    %s159 = ssub.s32 %s32, %s39
    %s160 = sor.u32 %s158, %s159
    %p161 = scmp.eq.s32.totalorder %s160, 0
    %s163 = sadd.s32 %s162, 1
    %s164 = scalar_select %p161, %s162, %s163
    %p167 = pneg %p161
    %p168 = scmp.eq.s32.totalorder %s24, 4
    %p169 = por %p167, %p168
    %p170 = scmp.ne.s32.totalorder %s162, %s165
    %p171 = scmp.eq.s32.totalorder %s24, 0
    %p172 = por %p170, %p171
    %p173 = scmp.ne.s32.totalorder %s162, %s165
    %p174 = scmp.eq.s32.totalorder %s29, 4
    %p175 = por %p173, %p174
    %p176 = scmp.ne.s32.totalorder %s165, %s166
    %p177 = scmp.eq.s32.totalorder %s29, 0
    %p178 = por %p176, %p177
    %p179 = scmp.ne.s32.totalorder %s165, %s166
    %p180 = scmp.eq.s32.totalorder %s30, 4
    %p181 = por %p179, %p180
    %p183 = scmp.ne.s32.totalorder %s166, %s182
    %p184 = scmp.eq.s32.totalorder %s30, 0
    %p185 = por %p183, %p184
    %s186 = sld [smem:[#allocation4 + %s31]]
    %s187 = sld [smem:[#allocation4 + %s43]]
    %s188 = ssub.s32 %s186, %s187
    %p189 = scmp.eq.s32.totalorder %s188, 0
    %s191 = sadd.s32 %s190, 1
    %s192 = scalar_select %p189, %s190, %s191
    %p195 = pneg %p189
    %p196 = scmp.eq.s32.totalorder %s24, 4
    %p197 = por %p195, %p196
    %p198 = scmp.ne.s32.totalorder %s190, %s193
    %p199 = scmp.eq.s32.totalorder %s24, 0
    %p200 = por %p198, %p199
    %p201 = scmp.ne.s32.totalorder %s190, %s193
    %p202 = scmp.eq.s32.totalorder %s29, 4
    %p203 = por %p201, %p202
    %p204 = scmp.ne.s32.totalorder %s193, %s194
    %p205 = scmp.eq.s32.totalorder %s29, 0
    %p206 = por %p204, %p205
    %p207 = scmp.ne.s32.totalorder %s193, %s194
    %p208 = scmp.eq.s32.totalorder %s30, 4
    %p209 = por %p207, %p208
    %p211 = scmp.ne.s32.totalorder %s194, %s210
    %p212 = scmp.eq.s32.totalorder %s30, 0
    %p213 = por %p211, %p212
    %s214 = ssub.s32 %s31, %s43
    %p215 = scmp.eq.s32.totalorder %s214, 0
    %s217 = sadd.s32 %s216, 1
    %s218 = scalar_select %p215, %s216, %s217
    %p221 = pneg %p215
    %p222 = scmp.eq.s32.totalorder %s24, 4
    %p223 = por %p221, %p222
    %p224 = scmp.ne.s32.totalorder %s216, %s219
    %p225 = scmp.eq.s32.totalorder %s24, 0
    %p226 = por %p224, %p225
    %p227 = scmp.ne.s32.totalorder %s216, %s219
    %p228 = scmp.eq.s32.totalorder %s29, 4
    %p229 = por %p227, %p228
    %p230 = scmp.ne.s32.totalorder %s219, %s220
    %p231 = scmp.eq.s32.totalorder %s29, 0
    %p232 = por %p230, %p231
    %p233 = scmp.ne.s32.totalorder %s219, %s220
    %p234 = scmp.eq.s32.totalorder %s30, 4
    %p235 = por %p233, %p234
    %p237 = scmp.ne.s32.totalorder %s220, %s236
    %p238 = scmp.eq.s32.totalorder %s30, 0
    %p239 = por %p237, %p238
    %p240 = scmp.le.s32.totalorder 1, %s24
    %p241 = scmp.lt.s32.totalorder %s24, 6
    %p242 = pnand %p240, %p241
    %p243 = pneg %p242
    // Predicated region
    $region9: #{mixture_of_experts_forward.1} parent=5 // pred_check
      _
    $region10: #{mixture_of_experts_forward.1} parent=5 // pred_check_branch
      %245 = sbr.rel (%p242) target = $region12
    $region11: #{mixture_of_experts_forward.1} parent=5 // pred_region
      %s246 = ssub.s32 %s24, 1
    $region12: #{mixture_of_experts_forward.1} parent=5 // pred_fallthru
      _
    %p247 = scmp.lt.s32.totalorder %s24, 5
    // Predicated region
    $region13: #{mixture_of_experts_forward.1} parent=5 // pred_check
      %p248 = pneg %p247
    $region14: #{mixture_of_experts_forward.1} parent=5 // pred_check_branch
      %250 = sbr.rel (%p248) target = $region16
    $region15: #{mixture_of_experts_forward.1} parent=5 // pred_region
      // Predicated region
      $region17: #{mixture_of_experts_forward.1} parent=15 // pred_check
        %p251 = pneg %p56
      $region18: #{mixture_of_experts_forward.1} parent=15 // pred_check_branch
        %253 = sbr.rel (%p251) target = $region20
      $region19: #{mixture_of_experts_forward.1} parent=15 // pred_region
        %s254 = smul.u32 32, %s31
        %p255 = scmp.lt.s32.totalorder %s254, 159
        %s256 = scalar_select %p255, %s254, 159
        %s257 = smul.addr %s256, 4
        %s258 = scalar_lea.vmem %s2, %s257
        %s259 = smul.u32 32, %s31
      $region20: #{mixture_of_experts_forward.1} parent=15 // pred_fallthru
        _
      // Predicated region
      $region21: #{mixture_of_experts_forward.1} parent=15 // pred_check
        %p260 = pneg %p82
      $region22: #{mixture_of_experts_forward.1} parent=15 // pred_check_branch
        %262 = sbr.rel (%p260) target = $region24
      $region23: #{mixture_of_experts_forward.1} parent=15 // pred_region
        %s263 = smul.u32 32, %s31
        %p264 = scmp.lt.s32.totalorder %s263, 159
        %s265 = scalar_select %p264, %s263, 159
        %s266 = smul.addr %s265, 8
        %s267 = scalar_lea.vmem %s3, %s266
        %s268 = smul.u32 32, %s31
      $region24: #{mixture_of_experts_forward.1} parent=15 // pred_fallthru
        _
      // Predicated region
      $region25: #{mixture_of_experts_forward.1} parent=15 // pred_check
        %p269 = pneg %p112
      $region26: #{mixture_of_experts_forward.1} parent=15 // pred_check_branch
        %271 = sbr.rel (%p269) target = $region28
      $region27: #{mixture_of_experts_forward.1} parent=15 // pred_region
        %s272 = sld [smem:[#allocation4 + %s31]]
        %p273 = scmp.lt.s32.totalorder %s272, 3
        %s274 = scalar_select %p273, %s272, 3
        %p275 = scmp.lt.s32.totalorder %s32, 0
        %s276 = scalar_select %p275, %s32, 0
        %s277 = smul.addr %s274, 4
        %s278 = sadd.s32 %s276, %s277
        %s279 = smul.addr %s278, 4
        %s280 = scalar_lea.vmem %s4, %s279
        %s281 = sld [smem:[#allocation4 + %s31]]
      $region28: #{mixture_of_experts_forward.1} parent=15 // pred_fallthru
        _
      // Predicated region
      $region29: #{mixture_of_experts_forward.1} parent=15 // pred_check
        %p282 = pneg %p142
      $region30: #{mixture_of_experts_forward.1} parent=15 // pred_check_branch
        %284 = sbr.rel (%p282) target = $region32
      $region31: #{mixture_of_experts_forward.1} parent=15 // pred_region
        %s285 = sld [smem:[#allocation4 + %s31]]
        %p286 = scmp.lt.s32.totalorder %s285, 3
        %s287 = scalar_select %p286, %s285, 3
        %p288 = scmp.lt.s32.totalorder %s32, 0
        %s289 = scalar_select %p288, %s32, 0
        %s290 = sadd.s32 %s289, %s287
        %s291 = scalar_lea.vmem %s5, %s290
        %s292 = sld [smem:[#allocation4 + %s31]]
      $region32: #{mixture_of_experts_forward.1} parent=15 // pred_fallthru
        _
      // Predicated region
      $region33: #{mixture_of_experts_forward.1} parent=15 // pred_check
        %p293 = pneg %p172
      $region34: #{mixture_of_experts_forward.1} parent=15 // pred_check_branch
        %295 = sbr.rel (%p293) target = $region36
      $region35: #{mixture_of_experts_forward.1} parent=15 // pred_region
        %s296 = sld [smem:[#allocation4 + %s31]]
        %s297 = smul.u32 8, %s32
        %p298 = scmp.lt.s32.totalorder %s296, 3
        %s299 = scalar_select %p298, %s296, 3
        %p300 = scmp.lt.s32.totalorder %s297, 7
        %s301 = scalar_select %p300, %s297, 7
        %s302 = smul.addr %s299, 8
        %s303 = sadd.s32 %s301, %s302
        %s304 = smul.addr %s303, 4
        %s305 = scalar_lea.vmem %s6, %s304
        %s306 = sld [smem:[#allocation4 + %s31]]
        %s307 = smul.u32 8, %s32
      $region36: #{mixture_of_experts_forward.1} parent=15 // pred_fallthru
        _
      // Predicated region
      $region37: #{mixture_of_experts_forward.1} parent=15 // pred_check
        %p308 = pneg %p200
      $region38: #{mixture_of_experts_forward.1} parent=15 // pred_check_branch
        %310 = sbr.rel (%p308) target = $region40
      $region39: #{mixture_of_experts_forward.1} parent=15 // pred_region
        %s311 = sld [smem:[#allocation4 + %s31]]
        %p312 = scmp.lt.s32.totalorder %s311, 3
        %s313 = scalar_select %p312, %s311, 3
        %s314 = scalar_lea.vmem %s7, %s313
        %s315 = sld [smem:[#allocation4 + %s31]]
      $region40: #{mixture_of_experts_forward.1} parent=15 // pred_fallthru
        _
    $region16: #{mixture_of_experts_forward.1} parent=5 // pred_fallthru
      _
    %p316 = scmp.le.s32.totalorder 1, %s24
    %p317 = scmp.lt.s32.totalorder %s24, 6
    %p318 = pnand %p316, %p317
    %p319 = pneg %p318
    // Predicated region
    $region41: #{mixture_of_experts_forward.1} parent=5 // pred_check
      _
    $region42: #{mixture_of_experts_forward.1} parent=5 // pred_check_branch
      %321 = sbr.rel (%p318) target = $region44
    $region43: #{mixture_of_experts_forward.1} parent=5 // pred_region
      %s322 = ssub.s32 %s24, 1
      %s323 = smul.u32 32, %s33
      %p324 = scmp.lt.s32.totalorder %s323, 159
      %s325 = scalar_select %p324, %s323, 159
      %s326 = smul.addr %s325, 4
      %s327 = scalar_lea.vmem %s2, %s326
      %p328 = pneg %p62
      %p329 = pneg %p59
      %s330 = smul.u32 32, %s33
      %p331 = scmp.lt.s32.totalorder %s330, 159
      %s332 = scalar_select %p331, %s330, 159
      %s333 = smul.addr %s332, 8
      %s334 = scalar_lea.vmem %s3, %s333
      %p335 = pneg %p88
      %p336 = pneg %p85
      %s337 = sld [smem:[#allocation4 + %s33]]
      %p338 = scmp.lt.s32.totalorder %s337, 3
      %s339 = scalar_select %p338, %s337, 3
      %p340 = scmp.lt.s32.totalorder %s34, 0
      %s341 = scalar_select %p340, %s34, 0
      %s342 = smul.addr %s339, 4
      %s343 = sadd.s32 %s341, %s342
      %s344 = smul.addr %s343, 4
      %s345 = scalar_lea.vmem %s4, %s344
      %p346 = pneg %p118
      %p347 = pneg %p115
      %s348 = sld [smem:[#allocation4 + %s33]]
      %p349 = scmp.lt.s32.totalorder %s348, 3
      %s350 = scalar_select %p349, %s348, 3
      %p351 = scmp.lt.s32.totalorder %s34, 0
      %s352 = scalar_select %p351, %s34, 0
      %s353 = sadd.s32 %s352, %s350
      %s354 = scalar_lea.vmem %s5, %s353
      %p355 = pneg %p148
      %p356 = pneg %p145
      %s357 = sld [smem:[#allocation4 + %s33]]
      %s358 = smul.u32 8, %s34
      %p359 = scmp.lt.s32.totalorder %s357, 3
      %s360 = scalar_select %p359, %s357, 3
      %p361 = scmp.lt.s32.totalorder %s358, 7
      %s362 = scalar_select %p361, %s358, 7
      %s363 = smul.addr %s360, 8
      %s364 = sadd.s32 %s362, %s363
      %s365 = smul.addr %s364, 4
      %s366 = scalar_lea.vmem %s6, %s365
      %p367 = pneg %p178
      %p368 = pneg %p175
      %s369 = sld [smem:[#allocation4 + %s33]]
      %p370 = scmp.lt.s32.totalorder %s369, 3
      %s371 = scalar_select %p370, %s369, 3
      %s372 = scalar_lea.vmem %s7, %s371
      %p373 = pneg %p206
      %p374 = pneg %p203
      %p375 = pneg %p232
      %p376 = pneg %p229
      %s377 = smul.u32 32, %s33
      %p378 = scmp.lt.s32.totalorder %s377, 159
      %s379 = scalar_select %p378, %s377, 159
      %s380 = smul.addr %s379, 4
      %s381 = scalar_lea.vmem %s8, %s380
      %s382 = smul.u32 32, %s33
      %p383 = scmp.lt.s32.totalorder %s382, 159
      %s384 = scalar_select %p383, %s382, 159
      %s385 = smul.addr %s384, 4
      %s386 = scalar_lea.vmem %s2, %s385
      %s387 = smul.u32 32, %s33
      %s388 = smul.u32 32, %s33
      %p389 = scmp.lt.s32.totalorder %s388, 159
      %s390 = scalar_select %p389, %s388, 159
      %s391 = smul.addr %s390, 8
      %s392 = scalar_lea.vmem %s3, %s391
      %s393 = smul.u32 32, %s33
      %s394 = sld [smem:[#allocation4 + %s33]]
      %p395 = scmp.lt.s32.totalorder %s394, 3
      %s396 = scalar_select %p395, %s394, 3
      %p397 = scmp.lt.s32.totalorder %s34, 0
      %s398 = scalar_select %p397, %s34, 0
      %s399 = smul.addr %s396, 4
      %s400 = sadd.s32 %s398, %s399
      %s401 = smul.addr %s400, 4
      %s402 = scalar_lea.vmem %s4, %s401
      %s403 = sld [smem:[#allocation4 + %s33]]
      %s404 = sld [smem:[#allocation4 + %s33]]
      %p405 = scmp.lt.s32.totalorder %s404, 3
      %s406 = scalar_select %p405, %s404, 3
      %p407 = scmp.lt.s32.totalorder %s34, 0
      %s408 = scalar_select %p407, %s34, 0
      %s409 = sadd.s32 %s408, %s406
      %s410 = scalar_lea.vmem %s5, %s409
      %s411 = sld [smem:[#allocation4 + %s33]]
      %s412 = sld [smem:[#allocation4 + %s33]]
      %s413 = smul.u32 8, %s34
      %p414 = scmp.lt.s32.totalorder %s412, 3
      %s415 = scalar_select %p414, %s412, 3
      %p416 = scmp.lt.s32.totalorder %s413, 7
      %s417 = scalar_select %p416, %s413, 7
      %s418 = smul.addr %s415, 8
      %s419 = sadd.s32 %s417, %s418
      %s420 = smul.addr %s419, 4
      %s421 = scalar_lea.vmem %s6, %s420
      %s422 = sld [smem:[#allocation4 + %s33]]
      %s423 = smul.u32 8, %s34
      %s424 = sld [smem:[#allocation4 + %s33]]
      %p425 = scmp.lt.s32.totalorder %s424, 3
      %s426 = scalar_select %p425, %s424, 3
      %s427 = scalar_lea.vmem %s7, %s426
      %s428 = sld [smem:[#allocation4 + %s33]]
      %s429 = smul.u32 32, %s33
      %p430 = scmp.lt.s32.totalorder %s429, 159
      %s431 = scalar_select %p430, %s429, 159
      %s432 = smul.addr %s431, 4
      %s433 = scalar_lea.vmem %s8, %s432
      %s434 = smul.u32 32, %s33
      %s436 = sld [smem:[#allocation5 + %s33]]
      %p437 = scmp.gt.s32.totalorder %s436, 0
      // Predicated region
      $region45: #{mixture_of_experts_forward.1} parent=43 // pred_check
        %p438 = pneg %p437
      $region46: #{mixture_of_experts_forward.1} parent=43 // pred_check_branch
        %440 = sbr.rel (%p438) target = $region48
      $region47: #{mixture_of_experts_forward.1} parent=43 // pred_region
        %v441 = vld [vmem:[%s386] sm:$0xf]
        %v442 = vld [vmem:[%s386 + $0x4] sm:$0xf]
        %v443 = vld [vmem:[%s386 + $0x8] sm:$0xf]
        %v444 = vld [vmem:[%s386 + $0xc] sm:$0xf]
        %v445 = vld [vmem:[%s386 + $0x10] sm:$0xf]
        %v446 = vld [vmem:[%s386 + $0x14] sm:$0xf]
        %v447 = vld [vmem:[%s386 + $0x18] sm:$0xf]
        %v448 = vld [vmem:[%s386 + $0x1c] sm:$0xf]
        %v449 = vld [vmem:[%s386 + $0x20] sm:$0xf]
        %v450 = vld [vmem:[%s386 + $0x24] sm:$0xf]
        %v451 = vld [vmem:[%s386 + $0x28] sm:$0xf]
        %v452 = vld [vmem:[%s386 + $0x2c] sm:$0xf]
        %v453 = vld [vmem:[%s386 + $0x30] sm:$0xf]
        %v454 = vld [vmem:[%s386 + $0x34] sm:$0xf]
        %v455 = vld [vmem:[%s386 + $0x38] sm:$0xf]
        %v456 = vld [vmem:[%s386 + $0x3c] sm:$0xf]
        %v457 = vld [vmem:[%s386 + $0x40] sm:$0xf]
        %v458 = vld [vmem:[%s386 + $0x44] sm:$0xf]
        %v459 = vld [vmem:[%s386 + $0x48] sm:$0xf]
        %v460 = vld [vmem:[%s386 + $0x4c] sm:$0xf]
        %v461 = vld [vmem:[%s386 + $0x50] sm:$0xf]
        %v462 = vld [vmem:[%s386 + $0x54] sm:$0xf]
        %v463 = vld [vmem:[%s386 + $0x58] sm:$0xf]
        %v464 = vld [vmem:[%s386 + $0x5c] sm:$0xf]
        %v465 = vld [vmem:[%s386 + $0x60] sm:$0xf]
        %v466 = vld [vmem:[%s386 + $0x64] sm:$0xf]
        %v467 = vld [vmem:[%s386 + $0x68] sm:$0xf]
        %v468 = vld [vmem:[%s386 + $0x6c] sm:$0xf]
        %v469 = vld [vmem:[%s386 + $0x70] sm:$0xf]
        %v470 = vld [vmem:[%s386 + $0x74] sm:$0xf]
        %v471 = vld [vmem:[%s386 + $0x78] sm:$0xf]
        %v472 = vld [vmem:[%s386 + $0x7c] sm:$0xf]
        %v473 = vld [vmem:[%s402] sm:$0xf]
        %v474 = vld [vmem:[%s402 + $0x4] sm:$0xf]
        %v475 = vld [vmem:[%s402 + $0x8] sm:$0xf]
        %v476 = vld [vmem:[%s402 + $0xc] sm:$0xf]
        %v477 = vld [vmem:[%s410] sm:$0x1]
        %v479 = vlaneseq
        %v480 = vshrl.u32 %v479, 7
        %v481 = vsub.s32 0, %v480
        %v482 = vrot.slane %v477, %v481
        %v516 = vunpack.c.l.b16 %v441
        %v517 = vunpack.c.l.b16 %v442
        %v518 = vunpack.c.l.b16 %v443
        %v519 = vunpack.c.l.b16 %v444
        %v520 = vunpack.c.l.b16 %v445
        %v521 = vunpack.c.l.b16 %v446
        %v522 = vunpack.c.l.b16 %v447
        %v523 = vunpack.c.l.b16 %v448
        %v524 = vunpack.c.l.b16 %v449
        %v525 = vunpack.c.l.b16 %v450
        %v526 = vunpack.c.l.b16 %v451
        %v527 = vunpack.c.l.b16 %v452
        %v528 = vunpack.c.l.b16 %v453
        %v529 = vunpack.c.l.b16 %v454
        %v530 = vunpack.c.l.b16 %v455
        %v531 = vunpack.c.l.b16 %v456
        %v532 = vunpack.c.l.b16 %v457
        %v533 = vunpack.c.l.b16 %v458
        %v534 = vunpack.c.l.b16 %v459
        %v535 = vunpack.c.l.b16 %v460
        %v536 = vunpack.c.l.b16 %v461
        %v537 = vunpack.c.l.b16 %v462
        %v538 = vunpack.c.l.b16 %v463
        %v539 = vunpack.c.l.b16 %v464
        %v540 = vunpack.c.l.b16 %v465
        %v541 = vunpack.c.l.b16 %v466
        %v542 = vunpack.c.l.b16 %v467
        %v543 = vunpack.c.l.b16 %v468
        %v544 = vunpack.c.l.b16 %v469
        %v545 = vunpack.c.l.b16 %v470
        %v546 = vunpack.c.l.b16 %v471
        %v547 = vunpack.c.l.b16 %v472
        %v548 = vpack.c.b16 %v517, %v516
        %v549 = vpack.c.b16 %v519, %v518
        %v550 = vpack.c.b16 %v521, %v520
        %v551 = vpack.c.b16 %v523, %v522
        %v552 = vpack.c.b16 %v525, %v524
        %v553 = vpack.c.b16 %v527, %v526
        %v554 = vpack.c.b16 %v529, %v528
        %v555 = vpack.c.b16 %v531, %v530
        %v556 = vpack.c.b16 %v533, %v532
        %v557 = vpack.c.b16 %v535, %v534
        %v558 = vpack.c.b16 %v537, %v536
        %v559 = vpack.c.b16 %v539, %v538
        %v560 = vpack.c.b16 %v541, %v540
        %v561 = vpack.c.b16 %v543, %v542
        %v562 = vpack.c.b16 %v545, %v544
        %v563 = vpack.c.b16 %v547, %v546
        %v568 = vunpack.c.l.b16 %v473
        %v569 = vunpack.c.l.b16 %v474
        %v570 = vunpack.c.l.b16 %v475
        %v571 = vunpack.c.l.b16 %v476
        %v572 = vpack.c.b16 %v569, %v568
        %v573 = vpack.c.b16 %v571, %v570
        %vm576 = vcmask 261120
        %v578 = vsel %vm576, %v548, 0
        %v581 = vsel %vm576, %v549, 0
        %v584 = vsel %vm576, %v550, 0
        %v587 = vsel %vm576, %v551, 0
        %v590 = vsel %vm576, %v552, 0
        %v593 = vsel %vm576, %v553, 0
        %v596 = vsel %vm576, %v554, 0
        %v599 = vsel %vm576, %v555, 0
        %v602 = vsel %vm576, %v556, 0
        %v605 = vsel %vm576, %v557, 0
        %v608 = vsel %vm576, %v558, 0
        %v611 = vsel %vm576, %v559, 0
        %v614 = vsel %vm576, %v560, 0
        %v617 = vsel %vm576, %v561, 0
        %v620 = vsel %vm576, %v562, 0
        %v623 = vsel %vm576, %v563, 0
        %625 = vmatprep.subr.bf16.mxu0 0
        %626 = vmatpush1.bf16.msra.mxu0 0
        %627 = vmatprep.subr.bf16.mxu0 0
        %628 = vmatpush1.bf16.msra.mxu0 0
        %629 = vmatprep.subr.bf16.mxu0 0
        %630 = vmatpush1.bf16.msra.mxu0 0
        %631 = vmatprep.subr.bf16.mxu0 0
        %632 = vmatpush1.bf16.msra.mxu0 0
        %633 = vmatprep.subr.bf16.mxu0 0
        %634 = vmatpush1.bf16.msra.mxu0 0
        %635 = vmatprep.subr.bf16.mxu0 0
        %636 = vmatpush1.bf16.msra.mxu0 0
        %637 = vmatprep.subr.bf16.mxu0 0
        %638 = vmatpush1.bf16.msra.mxu0 %v573
        %639 = vmatprep.subr.bf16.mxu0 0
        %640 = vmatpush1.bf16.msra.mxu0 %v572
        %641 = vmatprep.subr.bf16.mxu0 0
        %642 = vmatpush2.bf16.msra.mxu0 0
        %643 = vmatprep.subr.bf16.mxu0 0
        %644 = vmatpush2.bf16.msra.mxu0 0
        %645 = vmatprep.subr.bf16.mxu0 0
        %646 = vmatpush2.bf16.msra.mxu0 0
        %647 = vmatprep.subr.bf16.mxu0 0
        %648 = vmatpush2.bf16.msra.mxu0 0
        %649 = vmatprep.subr.bf16.mxu0 0
        %650 = vmatpush2.bf16.msra.mxu0 0
        %651 = vmatprep.subr.bf16.mxu0 0
        %652 = vmatpush2.bf16.msra.mxu0 0
        %653 = vmatprep.subr.bf16.mxu0 0
        %654 = vmatpush2.bf16.msra.mxu0 0
        %655 = vmatprep.subr.bf16.mxu0 0
        %656 = vmatpush2.bf16.msra.mxu0 0
        %657 = vmatprep.mubr.bf16.mxu0 0
        %658 = vmatmul.mubr.bf16.gmra.mxu0 %v578
        %v659 = vpop.f32.mrf.mxu0
        %v660 = vadd.f32 %v482, %v659
        %v661 = vpop.f32.mrf.mxu0
        %v662 = vpop.f32.mrf.mxu0
        %v663 = vadd.f32 %v482, %v662
        %v664 = vpop.f32.mrf.mxu0
        %665 = vmatprep.mubr.bf16.mxu0 0
        %666 = vmatmul.mubr.bf16.gmra.mxu0 %v581
        %v667 = vpop.f32.mrf.mxu0
        %v668 = vadd.f32 %v482, %v667
        %v669 = vpop.f32.mrf.mxu0
        %v670 = vpop.f32.mrf.mxu0
        %v671 = vadd.f32 %v482, %v670
        %v672 = vpop.f32.mrf.mxu0
        %673 = vmatprep.mubr.bf16.mxu0 0
        %674 = vmatmul.mubr.bf16.gmra.mxu0 %v584
        %v675 = vpop.f32.mrf.mxu0
        %v676 = vadd.f32 %v482, %v675
        %v677 = vpop.f32.mrf.mxu0
        %v678 = vpop.f32.mrf.mxu0
        %v679 = vadd.f32 %v482, %v678
        %v680 = vpop.f32.mrf.mxu0
        %681 = vmatprep.mubr.bf16.mxu0 0
        %682 = vmatmul.mubr.bf16.gmra.mxu0 %v587
        %v683 = vpop.f32.mrf.mxu0
        %v684 = vadd.f32 %v482, %v683
        %v685 = vpop.f32.mrf.mxu0
        %v686 = vpop.f32.mrf.mxu0
        %v687 = vadd.f32 %v482, %v686
        %v688 = vpop.f32.mrf.mxu0
        %689 = vmatprep.mubr.bf16.mxu0 0
        %690 = vmatmul.mubr.bf16.gmra.mxu0 %v590
        %v691 = vpop.f32.mrf.mxu0
        %v692 = vadd.f32 %v482, %v691
        %v693 = vpop.f32.mrf.mxu0
        %v694 = vpop.f32.mrf.mxu0
        %v695 = vadd.f32 %v482, %v694
        %v696 = vpop.f32.mrf.mxu0
        %697 = vmatprep.mubr.bf16.mxu0 0
        %698 = vmatmul.mubr.bf16.gmra.mxu0 %v593
        %v699 = vpop.f32.mrf.mxu0
        %v700 = vadd.f32 %v482, %v699
        %v701 = vpop.f32.mrf.mxu0
        %v702 = vpop.f32.mrf.mxu0
        %v703 = vadd.f32 %v482, %v702
        %v704 = vpop.f32.mrf.mxu0
        %705 = vmatprep.mubr.bf16.mxu0 0
        %706 = vmatmul.mubr.bf16.gmra.mxu0 %v596
        %v707 = vpop.f32.mrf.mxu0
        %v708 = vadd.f32 %v482, %v707
        %v709 = vpop.f32.mrf.mxu0
        %v710 = vpop.f32.mrf.mxu0
        %v711 = vadd.f32 %v482, %v710
        %v712 = vpop.f32.mrf.mxu0
        %713 = vmatprep.mubr.bf16.mxu0 0
        %714 = vmatmul.mubr.bf16.gmra.mxu0 %v599
        %v715 = vpop.f32.mrf.mxu0
        %v716 = vadd.f32 %v482, %v715
        %v717 = vpop.f32.mrf.mxu0
        %v718 = vpop.f32.mrf.mxu0
        %v719 = vadd.f32 %v482, %v718
        %v720 = vpop.f32.mrf.mxu0
        %721 = vmatprep.mubr.bf16.mxu0 0
        %722 = vmatmul.mubr.bf16.gmra.mxu0 %v602
        %v723 = vpop.f32.mrf.mxu0
        %v724 = vadd.f32 %v482, %v723
        %v725 = vpop.f32.mrf.mxu0
        %v726 = vpop.f32.mrf.mxu0
        %v727 = vadd.f32 %v482, %v726
        %v728 = vpop.f32.mrf.mxu0
        %729 = vmatprep.mubr.bf16.mxu0 0
        %730 = vmatmul.mubr.bf16.gmra.mxu0 %v605
        %v731 = vpop.f32.mrf.mxu0
        %v732 = vadd.f32 %v482, %v731
        %v733 = vpop.f32.mrf.mxu0
        %v734 = vpop.f32.mrf.mxu0
        %v735 = vadd.f32 %v482, %v734
        %v736 = vpop.f32.mrf.mxu0
        %737 = vmatprep.mubr.bf16.mxu0 0
        %738 = vmatmul.mubr.bf16.gmra.mxu0 %v608
        %v739 = vpop.f32.mrf.mxu0
        %v740 = vadd.f32 %v482, %v739
        %v741 = vpop.f32.mrf.mxu0
        %v742 = vpop.f32.mrf.mxu0
        %v743 = vadd.f32 %v482, %v742
        %v744 = vpop.f32.mrf.mxu0
        %745 = vmatprep.mubr.bf16.mxu0 0
        %746 = vmatmul.mubr.bf16.gmra.mxu0 %v611
        %v747 = vpop.f32.mrf.mxu0
        %v748 = vadd.f32 %v482, %v747
        %v749 = vpop.f32.mrf.mxu0
        %v750 = vpop.f32.mrf.mxu0
        %v751 = vadd.f32 %v482, %v750
        %v752 = vpop.f32.mrf.mxu0
        %753 = vmatprep.mubr.bf16.mxu0 0
        %754 = vmatmul.mubr.bf16.gmra.mxu0 %v614
        %v755 = vpop.f32.mrf.mxu0
        %v756 = vadd.f32 %v482, %v755
        %v757 = vpop.f32.mrf.mxu0
        %v758 = vpop.f32.mrf.mxu0
        %v759 = vadd.f32 %v482, %v758
        %v760 = vpop.f32.mrf.mxu0
        %761 = vmatprep.mubr.bf16.mxu0 0
        %762 = vmatmul.mubr.bf16.gmra.mxu0 %v617
        %v763 = vpop.f32.mrf.mxu0
        %v764 = vadd.f32 %v482, %v763
        %v765 = vpop.f32.mrf.mxu0
        %v766 = vpop.f32.mrf.mxu0
        %v767 = vadd.f32 %v482, %v766
        %v768 = vpop.f32.mrf.mxu0
        %769 = vmatprep.mubr.bf16.mxu0 0
        %770 = vmatmul.mubr.bf16.gmra.mxu0 %v620
        %v771 = vpop.f32.mrf.mxu0
        %v772 = vadd.f32 %v482, %v771
        %v773 = vpop.f32.mrf.mxu0
        %v774 = vpop.f32.mrf.mxu0
        %v775 = vadd.f32 %v482, %v774
        %v776 = vpop.f32.mrf.mxu0
        %777 = vmatprep.mubr.bf16.mxu0 0
        %778 = vmatmul.mubr.bf16.gmra.mxu0 %v623
        %v779 = vpop.f32.mrf.mxu0
        %v780 = vadd.f32 %v482, %v779
        %v781 = vpop.f32.mrf.mxu0
        %v782 = vpop.f32.mrf.mxu0
        %v783 = vadd.f32 %v482, %v782
        %v784 = vpop.f32.mrf.mxu0
        %785 = vdwg.mxu0
        %v786 = vmax.f32 %v660, 0.0
        %v787 = vmax.f32 %v663, 0.0
        %v788 = vmax.f32 %v668, 0.0
        %v789 = vmax.f32 %v671, 0.0
        %v790 = vmax.f32 %v676, 0.0
        %v791 = vmax.f32 %v679, 0.0
        %v792 = vmax.f32 %v684, 0.0
        %v793 = vmax.f32 %v687, 0.0
        %v794 = vmax.f32 %v692, 0.0
        %v795 = vmax.f32 %v695, 0.0
        %v796 = vmax.f32 %v700, 0.0
        %v797 = vmax.f32 %v703, 0.0
        %v798 = vmax.f32 %v708, 0.0
        %v799 = vmax.f32 %v711, 0.0
        %v800 = vmax.f32 %v716, 0.0
        %v801 = vmax.f32 %v719, 0.0
        %v802 = vmax.f32 %v724, 0.0
        %v803 = vmax.f32 %v727, 0.0
        %v804 = vmax.f32 %v732, 0.0
        %v805 = vmax.f32 %v735, 0.0
        %v806 = vmax.f32 %v740, 0.0
        %v807 = vmax.f32 %v743, 0.0
        %v808 = vmax.f32 %v748, 0.0
        %v809 = vmax.f32 %v751, 0.0
        %v810 = vmax.f32 %v756, 0.0
        %v811 = vmax.f32 %v759, 0.0
        %v812 = vmax.f32 %v764, 0.0
        %v813 = vmax.f32 %v767, 0.0
        %v814 = vmax.f32 %v772, 0.0
        %v815 = vmax.f32 %v775, 0.0
        %v816 = vmax.f32 %v780, 0.0
        %v817 = vmax.f32 %v783, 0.0
        %v818 = vpack.c.bf16 %v787, %v786
        %v819 = vpack.c.bf16 %v789, %v788
        %v820 = vpack.c.bf16 %v791, %v790
        %v821 = vpack.c.bf16 %v793, %v792
        %v822 = vpack.c.bf16 %v795, %v794
        %v823 = vpack.c.bf16 %v797, %v796
        %v824 = vpack.c.bf16 %v799, %v798
        %v825 = vpack.c.bf16 %v801, %v800
        %v826 = vpack.c.bf16 %v803, %v802
        %v827 = vpack.c.bf16 %v805, %v804
        %v828 = vpack.c.bf16 %v807, %v806
        %v829 = vpack.c.bf16 %v809, %v808
        %v830 = vpack.c.bf16 %v811, %v810
        %v831 = vpack.c.bf16 %v813, %v812
        %v832 = vpack.c.bf16 %v815, %v814
        %v833 = vpack.c.bf16 %v817, %v816
        %v834 = vld [vmem:[%s421] sm:$0xf]
        %v835 = vld [vmem:[%s421 + $0x4] sm:$0xf]
        %v836 = vld [vmem:[%s421 + $0x8] sm:$0xf]
        %v837 = vld [vmem:[%s421 + $0xc] sm:$0xf]
        %v838 = vld [vmem:[%s421 + $0x10] sm:$0xf]
        %v839 = vld [vmem:[%s421 + $0x14] sm:$0xf]
        %v840 = vld [vmem:[%s421 + $0x18] sm:$0xf]
        %v841 = vld [vmem:[%s421 + $0x1c] sm:$0xf]
        %v850 = vunpack.c.l.b16 %v834
        %v851 = vunpack.c.l.b16 %v835
        %v852 = vunpack.c.l.b16 %v836
        %v853 = vunpack.c.l.b16 %v837
        %v854 = vunpack.c.l.b16 %v838
        %v855 = vunpack.c.l.b16 %v839
        %v856 = vunpack.c.l.b16 %v840
        %v857 = vunpack.c.l.b16 %v841
        %v858 = vpack.c.b16 %v851, %v850
        %v859 = vpack.c.b16 %v853, %v852
        %v860 = vpack.c.b16 %v855, %v854
        %v861 = vpack.c.b16 %v857, %v856
        %vm866 = vcmask 523264
        %v868 = vsel %vm866, %v818, 0
        %v871 = vsel %vm866, %v819, 0
        %v874 = vsel %vm866, %v820, 0
        %v877 = vsel %vm866, %v821, 0
        %v880 = vsel %vm866, %v822, 0
        %v883 = vsel %vm866, %v823, 0
        %v886 = vsel %vm866, %v824, 0
        %v889 = vsel %vm866, %v825, 0
        %v892 = vsel %vm866, %v826, 0
        %v895 = vsel %vm866, %v827, 0
        %v898 = vsel %vm866, %v828, 0
        %v901 = vsel %vm866, %v829, 0
        %v904 = vsel %vm866, %v830, 0
        %v907 = vsel %vm866, %v831, 0
        %v910 = vsel %vm866, %v832, 0
        %v913 = vsel %vm866, %v833, 0
        %915 = vmatprep.subr.bf16.mxu0 0
        %916 = vmatpush1.bf16.msra.mxu0 0
        %917 = vmatprep.subr.bf16.mxu0 0
        %918 = vmatpush1.bf16.msra.mxu0 0
        %919 = vmatprep.subr.bf16.mxu0 0
        %920 = vmatpush1.bf16.msra.mxu0 0
        %921 = vmatprep.subr.bf16.mxu0 0
        %922 = vmatpush1.bf16.msra.mxu0 0
        %923 = vmatprep.subr.bf16.mxu0 0
        %924 = vmatpush1.bf16.msra.mxu0 %v861
        %925 = vmatprep.subr.bf16.mxu0 0
        %926 = vmatpush1.bf16.msra.mxu0 %v860
        %927 = vmatprep.subr.bf16.mxu0 0
        %928 = vmatpush1.bf16.msra.mxu0 %v859
        %929 = vmatprep.subr.bf16.mxu0 0
        %930 = vmatpush1.bf16.msra.mxu0 %v858
        %931 = vmatprep.subr.bf16.mxu0 0
        %932 = vmatpush2.bf16.msra.mxu0 0
        %933 = vmatprep.subr.bf16.mxu0 0
        %934 = vmatpush2.bf16.msra.mxu0 0
        %935 = vmatprep.subr.bf16.mxu0 0
        %936 = vmatpush2.bf16.msra.mxu0 0
        %937 = vmatprep.subr.bf16.mxu0 0
        %938 = vmatpush2.bf16.msra.mxu0 0
        %939 = vmatprep.subr.bf16.mxu0 0
        %940 = vmatpush2.bf16.msra.mxu0 0
        %941 = vmatprep.subr.bf16.mxu0 0
        %942 = vmatpush2.bf16.msra.mxu0 0
        %943 = vmatprep.subr.bf16.mxu0 0
        %944 = vmatpush2.bf16.msra.mxu0 0
        %945 = vmatprep.subr.bf16.mxu0 0
        %946 = vmatpush2.bf16.msra.mxu0 0
        %947 = vmatprep.mubr.bf16.mxu0 0
        %948 = vmatmul.mubr.bf16.gmra.mxu0 %v868
        %v949 = vpop.f32.mrf.mxu0
        %v950 = vadd.f32 0.0, %v949
        %v951 = vpop.f32.mrf.mxu0
        %v952 = vpop.f32.mrf.mxu0
        %v953 = vadd.f32 0.0, %v952
        %v954 = vpop.f32.mrf.mxu0
        %955 = vmatprep.mubr.bf16.mxu0 0
        %956 = vmatmul.mubr.bf16.gmra.mxu0 %v871
        %v957 = vpop.f32.mrf.mxu0
        %v958 = vadd.f32 0.0, %v957
        %v959 = vpop.f32.mrf.mxu0
        %v960 = vpop.f32.mrf.mxu0
        %v961 = vadd.f32 0.0, %v960
        %v962 = vpop.f32.mrf.mxu0
        %963 = vmatprep.mubr.bf16.mxu0 0
        %964 = vmatmul.mubr.bf16.gmra.mxu0 %v874
        %v965 = vpop.f32.mrf.mxu0
        %v966 = vadd.f32 0.0, %v965
        %v967 = vpop.f32.mrf.mxu0
        %v968 = vpop.f32.mrf.mxu0
        %v969 = vadd.f32 0.0, %v968
        %v970 = vpop.f32.mrf.mxu0
        %971 = vmatprep.mubr.bf16.mxu0 0
        %972 = vmatmul.mubr.bf16.gmra.mxu0 %v877
        %v973 = vpop.f32.mrf.mxu0
        %v974 = vadd.f32 0.0, %v973
        %v975 = vpop.f32.mrf.mxu0
        %v976 = vpop.f32.mrf.mxu0
        %v977 = vadd.f32 0.0, %v976
        %v978 = vpop.f32.mrf.mxu0
        %979 = vmatprep.mubr.bf16.mxu0 0
        %980 = vmatmul.mubr.bf16.gmra.mxu0 %v880
        %v981 = vpop.f32.mrf.mxu0
        %v982 = vadd.f32 0.0, %v981
        %v983 = vpop.f32.mrf.mxu0
        %v984 = vpop.f32.mrf.mxu0
        %v985 = vadd.f32 0.0, %v984
        %v986 = vpop.f32.mrf.mxu0
        %987 = vmatprep.mubr.bf16.mxu0 0
        %988 = vmatmul.mubr.bf16.gmra.mxu0 %v883
        %v989 = vpop.f32.mrf.mxu0
        %v990 = vadd.f32 0.0, %v989
        %v991 = vpop.f32.mrf.mxu0
        %v992 = vpop.f32.mrf.mxu0
        %v993 = vadd.f32 0.0, %v992
        %v994 = vpop.f32.mrf.mxu0
        %995 = vmatprep.mubr.bf16.mxu0 0
        %996 = vmatmul.mubr.bf16.gmra.mxu0 %v886
        %v997 = vpop.f32.mrf.mxu0
        %v998 = vadd.f32 0.0, %v997
        %v999 = vpop.f32.mrf.mxu0
        %v1000 = vpop.f32.mrf.mxu0
        %v1001 = vadd.f32 0.0, %v1000
        %v1002 = vpop.f32.mrf.mxu0
        %1003 = vmatprep.mubr.bf16.mxu0 0
        %1004 = vmatmul.mubr.bf16.gmra.mxu0 %v889
        %v1005 = vpop.f32.mrf.mxu0
        %v1006 = vadd.f32 0.0, %v1005
        %v1007 = vpop.f32.mrf.mxu0
        %v1008 = vpop.f32.mrf.mxu0
        %v1009 = vadd.f32 0.0, %v1008
        %v1010 = vpop.f32.mrf.mxu0
        %1011 = vmatprep.mubr.bf16.mxu0 0
        %1012 = vmatmul.mubr.bf16.gmra.mxu0 %v892
        %v1013 = vpop.f32.mrf.mxu0
        %v1014 = vadd.f32 0.0, %v1013
        %v1015 = vpop.f32.mrf.mxu0
        %v1016 = vpop.f32.mrf.mxu0
        %v1017 = vadd.f32 0.0, %v1016
        %v1018 = vpop.f32.mrf.mxu0
        %1019 = vmatprep.mubr.bf16.mxu0 0
        %1020 = vmatmul.mubr.bf16.gmra.mxu0 %v895
        %v1021 = vpop.f32.mrf.mxu0
        %v1022 = vadd.f32 0.0, %v1021
        %v1023 = vpop.f32.mrf.mxu0
        %v1024 = vpop.f32.mrf.mxu0
        %v1025 = vadd.f32 0.0, %v1024
        %v1026 = vpop.f32.mrf.mxu0
        %1027 = vmatprep.mubr.bf16.mxu0 0
        %1028 = vmatmul.mubr.bf16.gmra.mxu0 %v898
        %v1029 = vpop.f32.mrf.mxu0
        %v1030 = vadd.f32 0.0, %v1029
        %v1031 = vpop.f32.mrf.mxu0
        %v1032 = vpop.f32.mrf.mxu0
        %v1033 = vadd.f32 0.0, %v1032
        %v1034 = vpop.f32.mrf.mxu0
        %1035 = vmatprep.mubr.bf16.mxu0 0
        %1036 = vmatmul.mubr.bf16.gmra.mxu0 %v901
        %v1037 = vpop.f32.mrf.mxu0
        %v1038 = vadd.f32 0.0, %v1037
        %v1039 = vpop.f32.mrf.mxu0
        %v1040 = vpop.f32.mrf.mxu0
        %v1041 = vadd.f32 0.0, %v1040
        %v1042 = vpop.f32.mrf.mxu0
        %1043 = vmatprep.mubr.bf16.mxu0 0
        %1044 = vmatmul.mubr.bf16.gmra.mxu0 %v904
        %v1045 = vpop.f32.mrf.mxu0
        %v1046 = vadd.f32 0.0, %v1045
        %v1047 = vpop.f32.mrf.mxu0
        %v1048 = vpop.f32.mrf.mxu0
        %v1049 = vadd.f32 0.0, %v1048
        %v1050 = vpop.f32.mrf.mxu0
        %1051 = vmatprep.mubr.bf16.mxu0 0
        %1052 = vmatmul.mubr.bf16.gmra.mxu0 %v907
        %v1053 = vpop.f32.mrf.mxu0
        %v1054 = vadd.f32 0.0, %v1053
        %v1055 = vpop.f32.mrf.mxu0
        %v1056 = vpop.f32.mrf.mxu0
        %v1057 = vadd.f32 0.0, %v1056
        %v1058 = vpop.f32.mrf.mxu0
        %1059 = vmatprep.mubr.bf16.mxu0 0
        %1060 = vmatmul.mubr.bf16.gmra.mxu0 %v910
        %v1061 = vpop.f32.mrf.mxu0
        %v1062 = vadd.f32 0.0, %v1061
        %v1063 = vpop.f32.mrf.mxu0
        %v1064 = vpop.f32.mrf.mxu0
        %v1065 = vadd.f32 0.0, %v1064
        %v1066 = vpop.f32.mrf.mxu0
        %1067 = vmatprep.mubr.bf16.mxu0 0
        %1068 = vmatmul.mubr.bf16.gmra.mxu0 %v913
        %v1069 = vpop.f32.mrf.mxu0
        %v1070 = vadd.f32 0.0, %v1069
        %v1071 = vpop.f32.mrf.mxu0
        %v1072 = vpop.f32.mrf.mxu0
        %v1073 = vadd.f32 0.0, %v1072
        %v1074 = vpop.f32.mrf.mxu0
        %1075 = vdwg.mxu0
        %p1076 = scmp.eq.s32.totalorder %s34, 0
        // Predicated region
        $region49: #{mixture_of_experts_forward.1} parent=47 // pred_check
          %p1077 = pneg %p1076
        $region50: #{mixture_of_experts_forward.1} parent=47 // pred_check_branch
          %1079 = sbr.rel (%p1077) target = $region52
        $region51: #{mixture_of_experts_forward.1} parent=47 // pred_region
          %1080 = vst.msk [vmem:[#allocation2] sm:$0xff] %vm576, %v950
          %1081 = vst.msk [vmem:[#allocation2 + $0x8] sm:$0xff] %vm576, %v953
          %1082 = vst.msk [vmem:[#allocation2 + $0x10] sm:$0xff] %vm576, %v958
          %1083 = vst.msk [vmem:[#allocation2 + $0x18] sm:$0xff] %vm576, %v961
          %1084 = vst.msk [vmem:[#allocation2 + $0x20] sm:$0xff] %vm576, %v966
          %1085 = vst.msk [vmem:[#allocation2 + $0x28] sm:$0xff] %vm576, %v969
          %1086 = vst.msk [vmem:[#allocation2 + $0x30] sm:$0xff] %vm576, %v974
          %1087 = vst.msk [vmem:[#allocation2 + $0x38] sm:$0xff] %vm576, %v977
          %1088 = vst.msk [vmem:[#allocation2 + $0x40] sm:$0xff] %vm576, %v982
          %1089 = vst.msk [vmem:[#allocation2 + $0x48] sm:$0xff] %vm576, %v985
          %1090 = vst.msk [vmem:[#allocation2 + $0x50] sm:$0xff] %vm576, %v990
          %1091 = vst.msk [vmem:[#allocation2 + $0x58] sm:$0xff] %vm576, %v993
          %1092 = vst.msk [vmem:[#allocation2 + $0x60] sm:$0xff] %vm576, %v998
          %1093 = vst.msk [vmem:[#allocation2 + $0x68] sm:$0xff] %vm576, %v1001
          %1094 = vst.msk [vmem:[#allocation2 + $0x70] sm:$0xff] %vm576, %v1006
          %1095 = vst.msk [vmem:[#allocation2 + $0x78] sm:$0xff] %vm576, %v1009
          %1096 = vst.msk [vmem:[#allocation2 + $0x80] sm:$0xff] %vm576, %v1014
          %1097 = vst.msk [vmem:[#allocation2 + $0x88] sm:$0xff] %vm576, %v1017
          %1098 = vst.msk [vmem:[#allocation2 + $0x90] sm:$0xff] %vm576, %v1022
          %1099 = vst.msk [vmem:[#allocation2 + $0x98] sm:$0xff] %vm576, %v1025
          %1100 = vst.msk [vmem:[#allocation2 + $0xa0] sm:$0xff] %vm576, %v1030
          %1101 = vst.msk [vmem:[#allocation2 + $0xa8] sm:$0xff] %vm576, %v1033
          %1102 = vst.msk [vmem:[#allocation2 + $0xb0] sm:$0xff] %vm576, %v1038
          %1103 = vst.msk [vmem:[#allocation2 + $0xb8] sm:$0xff] %vm576, %v1041
          %1104 = vst.msk [vmem:[#allocation2 + $0xc0] sm:$0xff] %vm576, %v1046
          %1105 = vst.msk [vmem:[#allocation2 + $0xc8] sm:$0xff] %vm576, %v1049
          %1106 = vst.msk [vmem:[#allocation2 + $0xd0] sm:$0xff] %vm576, %v1054
          %1107 = vst.msk [vmem:[#allocation2 + $0xd8] sm:$0xff] %vm576, %v1057
          %1108 = vst.msk [vmem:[#allocation2 + $0xe0] sm:$0xff] %vm576, %v1062
          %1109 = vst.msk [vmem:[#allocation2 + $0xe8] sm:$0xff] %vm576, %v1065
          %1110 = vst.msk [vmem:[#allocation2 + $0xf0] sm:$0xff] %vm576, %v1070
          %1111 = vst.msk [vmem:[#allocation2 + $0xf8] sm:$0xff] %vm576, %v1073
        $region52: #{mixture_of_experts_forward.1} parent=47 // pred_fallthru
          _
        %p1112 = scmp.ne.s32.totalorder %s34, 0
        // Predicated region
        $region53: #{mixture_of_experts_forward.1} parent=47 // pred_check
          %p1113 = pneg %p1112
        $region54: #{mixture_of_experts_forward.1} parent=47 // pred_check_branch
          %1115 = sbr.rel (%p1113) target = $region56
        $region55: #{mixture_of_experts_forward.1} parent=47 // pred_region
          %v1116 = vld [vmem:[#allocation2] sm:$0xff]
          %v1117 = vld [vmem:[#allocation2 + $0x8] sm:$0xff]
          %v1118 = vld [vmem:[#allocation2 + $0x10] sm:$0xff]
          %v1119 = vld [vmem:[#allocation2 + $0x18] sm:$0xff]
          %v1120 = vld [vmem:[#allocation2 + $0x20] sm:$0xff]
          %v1121 = vld [vmem:[#allocation2 + $0x28] sm:$0xff]
          %v1122 = vld [vmem:[#allocation2 + $0x30] sm:$0xff]
          %v1123 = vld [vmem:[#allocation2 + $0x38] sm:$0xff]
          %v1124 = vld [vmem:[#allocation2 + $0x40] sm:$0xff]
          %v1125 = vld [vmem:[#allocation2 + $0x48] sm:$0xff]
          %v1126 = vld [vmem:[#allocation2 + $0x50] sm:$0xff]
          %v1127 = vld [vmem:[#allocation2 + $0x58] sm:$0xff]
          %v1128 = vld [vmem:[#allocation2 + $0x60] sm:$0xff]
          %v1129 = vld [vmem:[#allocation2 + $0x68] sm:$0xff]
          %v1130 = vld [vmem:[#allocation2 + $0x70] sm:$0xff]
          %v1131 = vld [vmem:[#allocation2 + $0x78] sm:$0xff]
          %v1132 = vld [vmem:[#allocation2 + $0x80] sm:$0xff]
          %v1133 = vld [vmem:[#allocation2 + $0x88] sm:$0xff]
          %v1134 = vld [vmem:[#allocation2 + $0x90] sm:$0xff]
          %v1135 = vld [vmem:[#allocation2 + $0x98] sm:$0xff]
          %v1136 = vld [vmem:[#allocation2 + $0xa0] sm:$0xff]
          %v1137 = vld [vmem:[#allocation2 + $0xa8] sm:$0xff]
          %v1138 = vld [vmem:[#allocation2 + $0xb0] sm:$0xff]
          %v1139 = vld [vmem:[#allocation2 + $0xb8] sm:$0xff]
          %v1140 = vld [vmem:[#allocation2 + $0xc0] sm:$0xff]
          %v1141 = vld [vmem:[#allocation2 + $0xc8] sm:$0xff]
          %v1142 = vld [vmem:[#allocation2 + $0xd0] sm:$0xff]
          %v1143 = vld [vmem:[#allocation2 + $0xd8] sm:$0xff]
          %v1144 = vld [vmem:[#allocation2 + $0xe0] sm:$0xff]
          %v1145 = vld [vmem:[#allocation2 + $0xe8] sm:$0xff]
          %v1146 = vld [vmem:[#allocation2 + $0xf0] sm:$0xff]
          %v1147 = vld [vmem:[#allocation2 + $0xf8] sm:$0xff]
          %v1148 = vadd.f32 %v1116, %v950
          %v1149 = vadd.f32 %v1117, %v953
          %v1150 = vadd.f32 %v1118, %v958
          %v1151 = vadd.f32 %v1119, %v961
          %v1152 = vadd.f32 %v1120, %v966
          %v1153 = vadd.f32 %v1121, %v969
          %v1154 = vadd.f32 %v1122, %v974
          %v1155 = vadd.f32 %v1123, %v977
          %v1156 = vadd.f32 %v1124, %v982
          %v1157 = vadd.f32 %v1125, %v985
          %v1158 = vadd.f32 %v1126, %v990
          %v1159 = vadd.f32 %v1127, %v993
          %v1160 = vadd.f32 %v1128, %v998
          %v1161 = vadd.f32 %v1129, %v1001
          %v1162 = vadd.f32 %v1130, %v1006
          %v1163 = vadd.f32 %v1131, %v1009
          %v1164 = vadd.f32 %v1132, %v1014
          %v1165 = vadd.f32 %v1133, %v1017
          %v1166 = vadd.f32 %v1134, %v1022
          %v1167 = vadd.f32 %v1135, %v1025
          %v1168 = vadd.f32 %v1136, %v1030
          %v1169 = vadd.f32 %v1137, %v1033
          %v1170 = vadd.f32 %v1138, %v1038
          %v1171 = vadd.f32 %v1139, %v1041
          %v1172 = vadd.f32 %v1140, %v1046
          %v1173 = vadd.f32 %v1141, %v1049
          %v1174 = vadd.f32 %v1142, %v1054
          %v1175 = vadd.f32 %v1143, %v1057
          %v1176 = vadd.f32 %v1144, %v1062
          %v1177 = vadd.f32 %v1145, %v1065
          %v1178 = vadd.f32 %v1146, %v1070
          %v1179 = vadd.f32 %v1147, %v1073
          %1180 = vst.msk [vmem:[#allocation2] sm:$0xff] %vm576, %v1148
          %1181 = vst.msk [vmem:[#allocation2 + $0x8] sm:$0xff] %vm576, %v1149
          %1182 = vst.msk [vmem:[#allocation2 + $0x10] sm:$0xff] %vm576, %v1150
          %1183 = vst.msk [vmem:[#allocation2 + $0x18] sm:$0xff] %vm576, %v1151
          %1184 = vst.msk [vmem:[#allocation2 + $0x20] sm:$0xff] %vm576, %v1152
          %1185 = vst.msk [vmem:[#allocation2 + $0x28] sm:$0xff] %vm576, %v1153
          %1186 = vst.msk [vmem:[#allocation2 + $0x30] sm:$0xff] %vm576, %v1154
          %1187 = vst.msk [vmem:[#allocation2 + $0x38] sm:$0xff] %vm576, %v1155
          %1188 = vst.msk [vmem:[#allocation2 + $0x40] sm:$0xff] %vm576, %v1156
          %1189 = vst.msk [vmem:[#allocation2 + $0x48] sm:$0xff] %vm576, %v1157
          %1190 = vst.msk [vmem:[#allocation2 + $0x50] sm:$0xff] %vm576, %v1158
          %1191 = vst.msk [vmem:[#allocation2 + $0x58] sm:$0xff] %vm576, %v1159
          %1192 = vst.msk [vmem:[#allocation2 + $0x60] sm:$0xff] %vm576, %v1160
          %1193 = vst.msk [vmem:[#allocation2 + $0x68] sm:$0xff] %vm576, %v1161
          %1194 = vst.msk [vmem:[#allocation2 + $0x70] sm:$0xff] %vm576, %v1162
          %1195 = vst.msk [vmem:[#allocation2 + $0x78] sm:$0xff] %vm576, %v1163
          %1196 = vst.msk [vmem:[#allocation2 + $0x80] sm:$0xff] %vm576, %v1164
          %1197 = vst.msk [vmem:[#allocation2 + $0x88] sm:$0xff] %vm576, %v1165
          %1198 = vst.msk [vmem:[#allocation2 + $0x90] sm:$0xff] %vm576, %v1166
          %1199 = vst.msk [vmem:[#allocation2 + $0x98] sm:$0xff] %vm576, %v1167
          %1200 = vst.msk [vmem:[#allocation2 + $0xa0] sm:$0xff] %vm576, %v1168
          %1201 = vst.msk [vmem:[#allocation2 + $0xa8] sm:$0xff] %vm576, %v1169
          %1202 = vst.msk [vmem:[#allocation2 + $0xb0] sm:$0xff] %vm576, %v1170
          %1203 = vst.msk [vmem:[#allocation2 + $0xb8] sm:$0xff] %vm576, %v1171
          %1204 = vst.msk [vmem:[#allocation2 + $0xc0] sm:$0xff] %vm576, %v1172
          %1205 = vst.msk [vmem:[#allocation2 + $0xc8] sm:$0xff] %vm576, %v1173
          %1206 = vst.msk [vmem:[#allocation2 + $0xd0] sm:$0xff] %vm576, %v1174
          %1207 = vst.msk [vmem:[#allocation2 + $0xd8] sm:$0xff] %vm576, %v1175
          %1208 = vst.msk [vmem:[#allocation2 + $0xe0] sm:$0xff] %vm576, %v1176
          %1209 = vst.msk [vmem:[#allocation2 + $0xe8] sm:$0xff] %vm576, %v1177
          %1210 = vst.msk [vmem:[#allocation2 + $0xf0] sm:$0xff] %vm576, %v1178
          %1211 = vst.msk [vmem:[#allocation2 + $0xf8] sm:$0xff] %vm576, %v1179
        $region56: #{mixture_of_experts_forward.1} parent=47 // pred_fallthru
          _
        // Predicated region
        $region57: #{mixture_of_experts_forward.1} parent=47 // pred_check
          %p1212 = pneg %p1076
        $region58: #{mixture_of_experts_forward.1} parent=47 // pred_check_branch
          %1214 = sbr.rel (%p1212) target = $region60
        $region59: #{mixture_of_experts_forward.1} parent=47 // pred_region
          %v1215 = vld [vmem:[%s392] sm:$0xff]
          %v1216 = vld [vmem:[%s392 + $0x8] sm:$0xff]
          %v1217 = vld [vmem:[%s392 + $0x10] sm:$0xff]
          %v1218 = vld [vmem:[%s392 + $0x18] sm:$0xff]
          %v1219 = vld [vmem:[%s392 + $0x20] sm:$0xff]
          %v1220 = vld [vmem:[%s392 + $0x28] sm:$0xff]
          %v1221 = vld [vmem:[%s392 + $0x30] sm:$0xff]
          %v1222 = vld [vmem:[%s392 + $0x38] sm:$0xff]
          %v1223 = vld [vmem:[%s392 + $0x40] sm:$0xff]
          %v1224 = vld [vmem:[%s392 + $0x48] sm:$0xff]
          %v1225 = vld [vmem:[%s392 + $0x50] sm:$0xff]
          %v1226 = vld [vmem:[%s392 + $0x58] sm:$0xff]
          %v1227 = vld [vmem:[%s392 + $0x60] sm:$0xff]
          %v1228 = vld [vmem:[%s392 + $0x68] sm:$0xff]
          %v1229 = vld [vmem:[%s392 + $0x70] sm:$0xff]
          %v1230 = vld [vmem:[%s392 + $0x78] sm:$0xff]
          %v1231 = vld [vmem:[%s392 + $0x80] sm:$0xff]
          %v1232 = vld [vmem:[%s392 + $0x88] sm:$0xff]
          %v1233 = vld [vmem:[%s392 + $0x90] sm:$0xff]
          %v1234 = vld [vmem:[%s392 + $0x98] sm:$0xff]
          %v1235 = vld [vmem:[%s392 + $0xa0] sm:$0xff]
          %v1236 = vld [vmem:[%s392 + $0xa8] sm:$0xff]
          %v1237 = vld [vmem:[%s392 + $0xb0] sm:$0xff]
          %v1238 = vld [vmem:[%s392 + $0xb8] sm:$0xff]
          %v1239 = vld [vmem:[%s392 + $0xc0] sm:$0xff]
          %v1240 = vld [vmem:[%s392 + $0xc8] sm:$0xff]
          %v1241 = vld [vmem:[%s392 + $0xd0] sm:$0xff]
          %v1242 = vld [vmem:[%s392 + $0xd8] sm:$0xff]
          %v1243 = vld [vmem:[%s392 + $0xe0] sm:$0xff]
          %v1244 = vld [vmem:[%s392 + $0xe8] sm:$0xff]
          %v1245 = vld [vmem:[%s392 + $0xf0] sm:$0xff]
          %v1246 = vld [vmem:[%s392 + $0xf8] sm:$0xff]
          %v1247 = vld [vmem:[#allocation2] sm:$0xff]
          %v1248 = vld [vmem:[#allocation2 + $0x8] sm:$0xff]
          %v1249 = vld [vmem:[#allocation2 + $0x10] sm:$0xff]
          %v1250 = vld [vmem:[#allocation2 + $0x18] sm:$0xff]
          %v1251 = vld [vmem:[#allocation2 + $0x20] sm:$0xff]
          %v1252 = vld [vmem:[#allocation2 + $0x28] sm:$0xff]
          %v1253 = vld [vmem:[#allocation2 + $0x30] sm:$0xff]
          %v1254 = vld [vmem:[#allocation2 + $0x38] sm:$0xff]
          %v1255 = vld [vmem:[#allocation2 + $0x40] sm:$0xff]
          %v1256 = vld [vmem:[#allocation2 + $0x48] sm:$0xff]
          %v1257 = vld [vmem:[#allocation2 + $0x50] sm:$0xff]
          %v1258 = vld [vmem:[#allocation2 + $0x58] sm:$0xff]
          %v1259 = vld [vmem:[#allocation2 + $0x60] sm:$0xff]
          %v1260 = vld [vmem:[#allocation2 + $0x68] sm:$0xff]
          %v1261 = vld [vmem:[#allocation2 + $0x70] sm:$0xff]
          %v1262 = vld [vmem:[#allocation2 + $0x78] sm:$0xff]
          %v1263 = vld [vmem:[#allocation2 + $0x80] sm:$0xff]
          %v1264 = vld [vmem:[#allocation2 + $0x88] sm:$0xff]
          %v1265 = vld [vmem:[#allocation2 + $0x90] sm:$0xff]
          %v1266 = vld [vmem:[#allocation2 + $0x98] sm:$0xff]
          %v1267 = vld [vmem:[#allocation2 + $0xa0] sm:$0xff]
          %v1268 = vld [vmem:[#allocation2 + $0xa8] sm:$0xff]
          %v1269 = vld [vmem:[#allocation2 + $0xb0] sm:$0xff]
          %v1270 = vld [vmem:[#allocation2 + $0xb8] sm:$0xff]
          %v1271 = vld [vmem:[#allocation2 + $0xc0] sm:$0xff]
          %v1272 = vld [vmem:[#allocation2 + $0xc8] sm:$0xff]
          %v1273 = vld [vmem:[#allocation2 + $0xd0] sm:$0xff]
          %v1274 = vld [vmem:[#allocation2 + $0xd8] sm:$0xff]
          %v1275 = vld [vmem:[#allocation2 + $0xe0] sm:$0xff]
          %v1276 = vld [vmem:[#allocation2 + $0xe8] sm:$0xff]
          %v1277 = vld [vmem:[#allocation2 + $0xf0] sm:$0xff]
          %v1278 = vld [vmem:[#allocation2 + $0xf8] sm:$0xff]
          %v1279 = vld [vmem:[%s427] sm:$0x1]
          %v1281 = vlaneseq
          %v1282 = vshrl.u32 %v1281, 7
          %v1283 = vsub.s32 0, %v1282
          %v1284 = vrot.slane %v1279, %v1283
          %v1286 = vadd.f32 %v1247, %v1284
          %v1287 = vadd.f32 %v1248, %v1284
          %v1288 = vadd.f32 %v1249, %v1284
          %v1289 = vadd.f32 %v1250, %v1284
          %v1290 = vadd.f32 %v1251, %v1284
          %v1291 = vadd.f32 %v1252, %v1284
          %v1292 = vadd.f32 %v1253, %v1284
          %v1293 = vadd.f32 %v1254, %v1284
          %v1294 = vadd.f32 %v1255, %v1284
          %v1295 = vadd.f32 %v1256, %v1284
          %v1296 = vadd.f32 %v1257, %v1284
          %v1297 = vadd.f32 %v1258, %v1284
          %v1298 = vadd.f32 %v1259, %v1284
          %v1299 = vadd.f32 %v1260, %v1284
          %v1300 = vadd.f32 %v1261, %v1284
          %v1301 = vadd.f32 %v1262, %v1284
          %v1302 = vadd.f32 %v1263, %v1284
          %v1303 = vadd.f32 %v1264, %v1284
          %v1304 = vadd.f32 %v1265, %v1284
          %v1305 = vadd.f32 %v1266, %v1284
          %v1306 = vadd.f32 %v1267, %v1284
          %v1307 = vadd.f32 %v1268, %v1284
          %v1308 = vadd.f32 %v1269, %v1284
          %v1309 = vadd.f32 %v1270, %v1284
          %v1310 = vadd.f32 %v1271, %v1284
          %v1311 = vadd.f32 %v1272, %v1284
          %v1312 = vadd.f32 %v1273, %v1284
          %v1313 = vadd.f32 %v1274, %v1284
          %v1314 = vadd.f32 %v1275, %v1284
          %v1315 = vadd.f32 %v1276, %v1284
          %v1316 = vadd.f32 %v1277, %v1284
          %v1317 = vadd.f32 %v1278, %v1284
          %1319 = vset.pattern.permute.xlu0 0
          %1320 = vperm.xlu0 %1319, %v1215
          %v1321 = vpop.permute.xlu0 %1320
          %1324 = vset.pattern.permute.xlu0 0
          %1325 = vperm.xlu0 %1324, %v1216
          %v1326 = vpop.permute.xlu0 %1325
          %1329 = vset.pattern.permute.xlu0 0
          %1330 = vperm.xlu0 %1329, %v1217
          %v1331 = vpop.permute.xlu0 %1330
          %1334 = vset.pattern.permute.xlu0 0
          %1335 = vperm.xlu0 %1334, %v1218
          %v1336 = vpop.permute.xlu0 %1335
          %1339 = vset.pattern.permute.xlu0 0
          %1340 = vperm.xlu0 %1339, %v1219
          %v1341 = vpop.permute.xlu0 %1340
          %1344 = vset.pattern.permute.xlu0 0
          %1345 = vperm.xlu0 %1344, %v1220
          %v1346 = vpop.permute.xlu0 %1345
          %1349 = vset.pattern.permute.xlu0 0
          %1350 = vperm.xlu0 %1349, %v1221
          %v1351 = vpop.permute.xlu0 %1350
          %1354 = vset.pattern.permute.xlu0 0
          %1355 = vperm.xlu0 %1354, %v1222
          %v1356 = vpop.permute.xlu0 %1355
          %1359 = vset.pattern.permute.xlu0 0
          %1360 = vperm.xlu0 %1359, %v1223
          %v1361 = vpop.permute.xlu0 %1360
          %1364 = vset.pattern.permute.xlu0 0
          %1365 = vperm.xlu0 %1364, %v1224
          %v1366 = vpop.permute.xlu0 %1365
          %1369 = vset.pattern.permute.xlu0 0
          %1370 = vperm.xlu0 %1369, %v1225
          %v1371 = vpop.permute.xlu0 %1370
          %1374 = vset.pattern.permute.xlu0 0
          %1375 = vperm.xlu0 %1374, %v1226
          %v1376 = vpop.permute.xlu0 %1375
          %1379 = vset.pattern.permute.xlu0 0
          %1380 = vperm.xlu0 %1379, %v1227
          %v1381 = vpop.permute.xlu0 %1380
          %1384 = vset.pattern.permute.xlu0 0
          %1385 = vperm.xlu0 %1384, %v1228
          %v1386 = vpop.permute.xlu0 %1385
          %1389 = vset.pattern.permute.xlu0 0
          %1390 = vperm.xlu0 %1389, %v1229
          %v1391 = vpop.permute.xlu0 %1390
          %1394 = vset.pattern.permute.xlu0 0
          %1395 = vperm.xlu0 %1394, %v1230
          %v1396 = vpop.permute.xlu0 %1395
          %1399 = vset.pattern.permute.xlu0 0
          %1400 = vperm.xlu0 %1399, %v1231
          %v1401 = vpop.permute.xlu0 %1400
          %1404 = vset.pattern.permute.xlu0 0
          %1405 = vperm.xlu0 %1404, %v1232
          %v1406 = vpop.permute.xlu0 %1405
          %1409 = vset.pattern.permute.xlu0 0
          %1410 = vperm.xlu0 %1409, %v1233
          %v1411 = vpop.permute.xlu0 %1410
          %1414 = vset.pattern.permute.xlu0 0
          %1415 = vperm.xlu0 %1414, %v1234
          %v1416 = vpop.permute.xlu0 %1415
          %1419 = vset.pattern.permute.xlu0 0
          %1420 = vperm.xlu0 %1419, %v1235
          %v1421 = vpop.permute.xlu0 %1420
          %1424 = vset.pattern.permute.xlu0 0
          %1425 = vperm.xlu0 %1424, %v1236
          %v1426 = vpop.permute.xlu0 %1425
          %1429 = vset.pattern.permute.xlu0 0
          %1430 = vperm.xlu0 %1429, %v1237
          %v1431 = vpop.permute.xlu0 %1430
          %1434 = vset.pattern.permute.xlu0 0
          %1435 = vperm.xlu0 %1434, %v1238
          %v1436 = vpop.permute.xlu0 %1435
          %1439 = vset.pattern.permute.xlu0 0
          %1440 = vperm.xlu0 %1439, %v1239
          %v1441 = vpop.permute.xlu0 %1440
          %1444 = vset.pattern.permute.xlu0 0
          %1445 = vperm.xlu0 %1444, %v1240
          %v1446 = vpop.permute.xlu0 %1445
          %1449 = vset.pattern.permute.xlu0 0
          %1450 = vperm.xlu0 %1449, %v1241
          %v1451 = vpop.permute.xlu0 %1450
          %1454 = vset.pattern.permute.xlu0 0
          %1455 = vperm.xlu0 %1454, %v1242
          %v1456 = vpop.permute.xlu0 %1455
          %1459 = vset.pattern.permute.xlu0 0
          %1460 = vperm.xlu0 %1459, %v1243
          %v1461 = vpop.permute.xlu0 %1460
          %1464 = vset.pattern.permute.xlu0 0
          %1465 = vperm.xlu0 %1464, %v1244
          %v1466 = vpop.permute.xlu0 %1465
          %1469 = vset.pattern.permute.xlu0 0
          %1470 = vperm.xlu0 %1469, %v1245
          %v1471 = vpop.permute.xlu0 %1470
          %1474 = vset.pattern.permute.xlu0 0
          %1475 = vperm.xlu0 %1474, %v1246
          %v1476 = vpop.permute.xlu0 %1475
          %v1478 = vmul.f32 %v1321, %v1286
          %v1479 = vmul.f32 %v1326, %v1287
          %v1480 = vmul.f32 %v1331, %v1288
          %v1481 = vmul.f32 %v1336, %v1289
          %v1482 = vmul.f32 %v1341, %v1290
          %v1483 = vmul.f32 %v1346, %v1291
          %v1484 = vmul.f32 %v1351, %v1292
          %v1485 = vmul.f32 %v1356, %v1293
          %v1486 = vmul.f32 %v1361, %v1294
          %v1487 = vmul.f32 %v1366, %v1295
          %v1488 = vmul.f32 %v1371, %v1296
          %v1489 = vmul.f32 %v1376, %v1297
          %v1490 = vmul.f32 %v1381, %v1298
          %v1491 = vmul.f32 %v1386, %v1299
          %v1492 = vmul.f32 %v1391, %v1300
          %v1493 = vmul.f32 %v1396, %v1301
          %v1494 = vmul.f32 %v1401, %v1302
          %v1495 = vmul.f32 %v1406, %v1303
          %v1496 = vmul.f32 %v1411, %v1304
          %v1497 = vmul.f32 %v1416, %v1305
          %v1498 = vmul.f32 %v1421, %v1306
          %v1499 = vmul.f32 %v1426, %v1307
          %v1500 = vmul.f32 %v1431, %v1308
          %v1501 = vmul.f32 %v1436, %v1309
          %v1502 = vmul.f32 %v1441, %v1310
          %v1503 = vmul.f32 %v1446, %v1311
          %v1504 = vmul.f32 %v1451, %v1312
          %v1505 = vmul.f32 %v1456, %v1313
          %v1506 = vmul.f32 %v1461, %v1314
          %v1507 = vmul.f32 %v1466, %v1315
          %v1508 = vmul.f32 %v1471, %v1316
          %v1509 = vmul.f32 %v1476, %v1317
          %v1510 = vpack.c.bf16 %v1479, %v1478
          %v1511 = vpack.c.bf16 %v1481, %v1480
          %v1512 = vpack.c.bf16 %v1483, %v1482
          %v1513 = vpack.c.bf16 %v1485, %v1484
          %v1514 = vpack.c.bf16 %v1487, %v1486
          %v1515 = vpack.c.bf16 %v1489, %v1488
          %v1516 = vpack.c.bf16 %v1491, %v1490
          %v1517 = vpack.c.bf16 %v1493, %v1492
          %v1518 = vpack.c.bf16 %v1495, %v1494
          %v1519 = vpack.c.bf16 %v1497, %v1496
          %v1520 = vpack.c.bf16 %v1499, %v1498
          %v1521 = vpack.c.bf16 %v1501, %v1500
          %v1522 = vpack.c.bf16 %v1503, %v1502
          %v1523 = vpack.c.bf16 %v1505, %v1504
          %v1524 = vpack.c.bf16 %v1507, %v1506
          %v1525 = vpack.c.bf16 %v1509, %v1508
          %v1542 = vunpack.c.l.b16 %v1510
          %v1543 = vunpack.c.h.b16 %v1510
          %v1544 = vunpack.c.l.b16 %v1511
          %v1545 = vunpack.c.h.b16 %v1511
          %v1546 = vunpack.c.l.b16 %v1512
          %v1547 = vunpack.c.h.b16 %v1512
          %v1548 = vunpack.c.l.b16 %v1513
          %v1549 = vunpack.c.h.b16 %v1513
          %v1550 = vunpack.c.l.b16 %v1514
          %v1551 = vunpack.c.h.b16 %v1514
          %v1552 = vunpack.c.l.b16 %v1515
          %v1553 = vunpack.c.h.b16 %v1515
          %v1554 = vunpack.c.l.b16 %v1516
          %v1555 = vunpack.c.h.b16 %v1516
          %v1556 = vunpack.c.l.b16 %v1517
          %v1557 = vunpack.c.h.b16 %v1517
          %v1558 = vunpack.c.l.b16 %v1518
          %v1559 = vunpack.c.h.b16 %v1518
          %v1560 = vunpack.c.l.b16 %v1519
          %v1561 = vunpack.c.h.b16 %v1519
          %v1562 = vunpack.c.l.b16 %v1520
          %v1563 = vunpack.c.h.b16 %v1520
          %v1564 = vunpack.c.l.b16 %v1521
          %v1565 = vunpack.c.h.b16 %v1521
          %v1566 = vunpack.c.l.b16 %v1522
          %v1567 = vunpack.c.h.b16 %v1522
          %v1568 = vunpack.c.l.b16 %v1523
          %v1569 = vunpack.c.h.b16 %v1523
          %v1570 = vunpack.c.l.b16 %v1524
          %v1571 = vunpack.c.h.b16 %v1524
          %v1572 = vunpack.c.l.b16 %v1525
          %v1573 = vunpack.c.h.b16 %v1525
          %v1574 = vpack.c.b16 %v1542, %v1542
          %v1575 = vpack.c.b16 %v1543, %v1543
          %v1576 = vpack.c.b16 %v1544, %v1544
          %v1577 = vpack.c.b16 %v1545, %v1545
          %v1578 = vpack.c.b16 %v1546, %v1546
          %v1579 = vpack.c.b16 %v1547, %v1547
          %v1580 = vpack.c.b16 %v1548, %v1548
          %v1581 = vpack.c.b16 %v1549, %v1549
          %v1582 = vpack.c.b16 %v1550, %v1550
          %v1583 = vpack.c.b16 %v1551, %v1551
          %v1584 = vpack.c.b16 %v1552, %v1552
          %v1585 = vpack.c.b16 %v1553, %v1553
          %v1586 = vpack.c.b16 %v1554, %v1554
          %v1587 = vpack.c.b16 %v1555, %v1555
          %v1588 = vpack.c.b16 %v1556, %v1556
          %v1589 = vpack.c.b16 %v1557, %v1557
          %v1590 = vpack.c.b16 %v1558, %v1558
          %v1591 = vpack.c.b16 %v1559, %v1559
          %v1592 = vpack.c.b16 %v1560, %v1560
          %v1593 = vpack.c.b16 %v1561, %v1561
          %v1594 = vpack.c.b16 %v1562, %v1562
          %v1595 = vpack.c.b16 %v1563, %v1563
          %v1596 = vpack.c.b16 %v1564, %v1564
          %v1597 = vpack.c.b16 %v1565, %v1565
          %v1598 = vpack.c.b16 %v1566, %v1566
          %v1599 = vpack.c.b16 %v1567, %v1567
          %v1600 = vpack.c.b16 %v1568, %v1568
          %v1601 = vpack.c.b16 %v1569, %v1569
          %v1602 = vpack.c.b16 %v1570, %v1570
          %v1603 = vpack.c.b16 %v1571, %v1571
          %v1604 = vpack.c.b16 %v1572, %v1572
          %v1605 = vpack.c.b16 %v1573, %v1573
          %vm1638 = vcmask 257024
          %1639 = vst.msk [vmem:[%s433] sm:$0xf] %vm1638, %v1574
          %1640 = vst.msk [vmem:[%s433 + $0x4] sm:$0xf] %vm1638, %v1575
          %1641 = vst.msk [vmem:[%s433 + $0x8] sm:$0xf] %vm1638, %v1576
          %1642 = vst.msk [vmem:[%s433 + $0xc] sm:$0xf] %vm1638, %v1577
          %1643 = vst.msk [vmem:[%s433 + $0x10] sm:$0xf] %vm1638, %v1578
          %1644 = vst.msk [vmem:[%s433 + $0x14] sm:$0xf] %vm1638, %v1579
          %1645 = vst.msk [vmem:[%s433 + $0x18] sm:$0xf] %vm1638, %v1580
          %1646 = vst.msk [vmem:[%s433 + $0x1c] sm:$0xf] %vm1638, %v1581
          %1647 = vst.msk [vmem:[%s433 + $0x20] sm:$0xf] %vm1638, %v1582
          %1648 = vst.msk [vmem:[%s433 + $0x24] sm:$0xf] %vm1638, %v1583
          %1649 = vst.msk [vmem:[%s433 + $0x28] sm:$0xf] %vm1638, %v1584
          %1650 = vst.msk [vmem:[%s433 + $0x2c] sm:$0xf] %vm1638, %v1585
          %1651 = vst.msk [vmem:[%s433 + $0x30] sm:$0xf] %vm1638, %v1586
          %1652 = vst.msk [vmem:[%s433 + $0x34] sm:$0xf] %vm1638, %v1587
          %1653 = vst.msk [vmem:[%s433 + $0x38] sm:$0xf] %vm1638, %v1588
          %1654 = vst.msk [vmem:[%s433 + $0x3c] sm:$0xf] %vm1638, %v1589
          %1655 = vst.msk [vmem:[%s433 + $0x40] sm:$0xf] %vm1638, %v1590
          %1656 = vst.msk [vmem:[%s433 + $0x44] sm:$0xf] %vm1638, %v1591
          %1657 = vst.msk [vmem:[%s433 + $0x48] sm:$0xf] %vm1638, %v1592
          %1658 = vst.msk [vmem:[%s433 + $0x4c] sm:$0xf] %vm1638, %v1593
          %1659 = vst.msk [vmem:[%s433 + $0x50] sm:$0xf] %vm1638, %v1594
          %1660 = vst.msk [vmem:[%s433 + $0x54] sm:$0xf] %vm1638, %v1595
          %1661 = vst.msk [vmem:[%s433 + $0x58] sm:$0xf] %vm1638, %v1596
          %1662 = vst.msk [vmem:[%s433 + $0x5c] sm:$0xf] %vm1638, %v1597
          %1663 = vst.msk [vmem:[%s433 + $0x60] sm:$0xf] %vm1638, %v1598
          %1664 = vst.msk [vmem:[%s433 + $0x64] sm:$0xf] %vm1638, %v1599
          %1665 = vst.msk [vmem:[%s433 + $0x68] sm:$0xf] %vm1638, %v1600
          %1666 = vst.msk [vmem:[%s433 + $0x6c] sm:$0xf] %vm1638, %v1601
          %1667 = vst.msk [vmem:[%s433 + $0x70] sm:$0xf] %vm1638, %v1602
          %1668 = vst.msk [vmem:[%s433 + $0x74] sm:$0xf] %vm1638, %v1603
          %1669 = vst.msk [vmem:[%s433 + $0x78] sm:$0xf] %vm1638, %v1604
          %1670 = vst.msk [vmem:[%s433 + $0x7c] sm:$0xf] %vm1638, %v1605
        $region60: #{mixture_of_experts_forward.1} parent=47 // pred_fallthru
          _
      $region48: #{mixture_of_experts_forward.1} parent=43 // pred_fallthru
        _
      %p1671 = scmp.le.s32.totalorder %s436, 0
      %p1672 = scmp.eq.s32.totalorder %s34, 0
      %p1673 = pnand %p1671, %p1672
      %p1674 = pneg %p1673
      // Predicated region
      $region61: #{mixture_of_experts_forward.1} parent=43 // pred_check
        _
      $region62: #{mixture_of_experts_forward.1} parent=43 // pred_check_branch
        %1676 = sbr.rel (%p1673) target = $region64
      $region63: #{mixture_of_experts_forward.1} parent=43 // pred_region
        %vm1677 = vcmask 257024
        %1678 = vst.msk [vmem:[%s433] sm:$0xf] %vm1677, 0
        %1679 = vst.msk [vmem:[%s433 + $0x4] sm:$0xf] %vm1677, 0
        %1680 = vst.msk [vmem:[%s433 + $0x8] sm:$0xf] %vm1677, 0
        %1681 = vst.msk [vmem:[%s433 + $0xc] sm:$0xf] %vm1677, 0
        %1682 = vst.msk [vmem:[%s433 + $0x10] sm:$0xf] %vm1677, 0
        %1683 = vst.msk [vmem:[%s433 + $0x14] sm:$0xf] %vm1677, 0
        %1684 = vst.msk [vmem:[%s433 + $0x18] sm:$0xf] %vm1677, 0
        %1685 = vst.msk [vmem:[%s433 + $0x1c] sm:$0xf] %vm1677, 0
        %1686 = vst.msk [vmem:[%s433 + $0x20] sm:$0xf] %vm1677, 0
        %1687 = vst.msk [vmem:[%s433 + $0x24] sm:$0xf] %vm1677, 0
        %1688 = vst.msk [vmem:[%s433 + $0x28] sm:$0xf] %vm1677, 0
        %1689 = vst.msk [vmem:[%s433 + $0x2c] sm:$0xf] %vm1677, 0
        %1690 = vst.msk [vmem:[%s433 + $0x30] sm:$0xf] %vm1677, 0
        %1691 = vst.msk [vmem:[%s433 + $0x34] sm:$0xf] %vm1677, 0
        %1692 = vst.msk [vmem:[%s433 + $0x38] sm:$0xf] %vm1677, 0
        %1693 = vst.msk [vmem:[%s433 + $0x3c] sm:$0xf] %vm1677, 0
        %1694 = vst.msk [vmem:[%s433 + $0x40] sm:$0xf] %vm1677, 0
        %1695 = vst.msk [vmem:[%s433 + $0x44] sm:$0xf] %vm1677, 0
        %1696 = vst.msk [vmem:[%s433 + $0x48] sm:$0xf] %vm1677, 0
        %1697 = vst.msk [vmem:[%s433 + $0x4c] sm:$0xf] %vm1677, 0
        %1698 = vst.msk [vmem:[%s433 + $0x50] sm:$0xf] %vm1677, 0
        %1699 = vst.msk [vmem:[%s433 + $0x54] sm:$0xf] %vm1677, 0
        %1700 = vst.msk [vmem:[%s433 + $0x58] sm:$0xf] %vm1677, 0
        %1701 = vst.msk [vmem:[%s433 + $0x5c] sm:$0xf] %vm1677, 0
        %1702 = vst.msk [vmem:[%s433 + $0x60] sm:$0xf] %vm1677, 0
        %1703 = vst.msk [vmem:[%s433 + $0x64] sm:$0xf] %vm1677, 0
        %1704 = vst.msk [vmem:[%s433 + $0x68] sm:$0xf] %vm1677, 0
        %1705 = vst.msk [vmem:[%s433 + $0x6c] sm:$0xf] %vm1677, 0
        %1706 = vst.msk [vmem:[%s433 + $0x70] sm:$0xf] %vm1677, 0
        %1707 = vst.msk [vmem:[%s433 + $0x74] sm:$0xf] %vm1677, 0
        %1708 = vst.msk [vmem:[%s433 + $0x78] sm:$0xf] %vm1677, 0
        %1709 = vst.msk [vmem:[%s433 + $0x7c] sm:$0xf] %vm1677, 0
      $region64: #{mixture_of_experts_forward.1} parent=43 // pred_fallthru
        _
      %s1710 = smul.u32 32, %s33
      %p1711 = scmp.lt.s32.totalorder %s1710, 159
      %s1712 = scalar_select %p1711, %s1710, 159
      %s1713 = smul.addr %s1712, 4
      %s1714 = scalar_lea.vmem %s8, %s1713
      // Predicated region
      $region65: #{mixture_of_experts_forward.1} parent=43 // pred_check
        %p1715 = pneg %p229
      $region66: #{mixture_of_experts_forward.1} parent=43 // pred_check_branch
        %1717 = sbr.rel (%p1715) target = $region68
      $region67: #{mixture_of_experts_forward.1} parent=43 // pred_region
        %s1718 = smul.u32 32, %s33
      $region68: #{mixture_of_experts_forward.1} parent=43 // pred_fallthru
        _
    $region44: #{mixture_of_experts_forward.1} parent=5 // pred_fallthru
      _
    %p1719 = scmp.le.s32.totalorder 2, %s24
    // Predicated region
    $region69: #{mixture_of_experts_forward.1} parent=5 // pred_check
      %p1720 = pneg %p1719
    $region70: #{mixture_of_experts_forward.1} parent=5 // pred_check_branch
      %1722 = sbr.rel (%p1720) target = $region72
    $region71: #{mixture_of_experts_forward.1} parent=5 // pred_region
      %s1723 = ssub.s32 %s24, 2
      // Predicated region
      $region73: #{mixture_of_experts_forward.1} parent=71 // pred_check
        %p1724 = pneg %p235
      $region74: #{mixture_of_experts_forward.1} parent=71 // pred_check_branch
        %1726 = sbr.rel (%p1724) target = $region76
      $region75: #{mixture_of_experts_forward.1} parent=71 // pred_region
        %s1727 = smul.u32 32, %s35
        %p1728 = scmp.lt.s32.totalorder %s1727, 159
        %s1729 = scalar_select %p1728, %s1727, 159
        %s1730 = smul.addr %s1729, 4
        %s1731 = scalar_lea.vmem %s8, %s1730
      $region76: #{mixture_of_experts_forward.1} parent=71 // pred_fallthru
        _
    $region72: #{mixture_of_experts_forward.1} parent=5 // pred_fallthru
      _
  $region6: #{mixture_of_experts_forward.1} parent=0 // loop_footer
    %s28 = sadd.s32 1, %s24
  $region7: #{mixture_of_experts_forward.1} parent=0 // loop_footer_branch
    %23 = sbr.rel target = $region3
  $region8: #{mixture_of_experts_forward.1} parent=0 // loop_exit
    _

</llo_original>
